<compile_context>
chip_gen: v6e
topology: v6e:2x2x1
jax: 0.10.0
libtpu: 0.0.40
codegen_flags: <defaults>
</compile_context>

<pallas_src>
import functools

import jax
import jax.numpy as jnp
from jax.experimental import pallas as pl
from jax.experimental.pallas import tpu as pltpu

# ----------------------------- small CLIP-like config -----------------------------
IMG = 16              # image resolution
PATCH = 8             # patch size  -> 2x2 = 4 patches
CHANNELS = 3          # RGB, as CLIP expects
HIDDEN = 32           # vision hidden size (scaled down from 768)
HEADS = 2
HEAD_DIM = HIDDEN // HEADS
INTERMEDIATE = 64     # MLP hidden (scaled down from 3072)
LAYERS = 2            # encoder layers (scaled down from 12)
PROJ_DIM = 512        # visual projection dim -> matches nn.Linear(512, 1)
LN_EPS = 1e-5

GRID_SIDE = IMG // PATCH
N_PATCH = GRID_SIDE * GRID_SIDE        # 4
SEQ = N_PATCH + 1                      # 5 real tokens (CLS + patches)
S_PAD = 8                              # sublane-aligned token slots per image (power of 2)
S_SHIFT = S_PAD.bit_length() - 1       # 3
PATCH_DIM = CHANNELS * PATCH * PATCH   # 192
ATTN_SCALE = float(HEAD_DIM) ** -0.5

# pl.reciprocal(approx=True) deviates ~1e-3 (relative) from exact softmax; set False for
# an exact divide at negligible cost if bit-level fidelity to the reference matters.
APPROX_SOFTMAX_RECIPROCAL = True

# -------------------- packed parameter slab layout: (SLAB_ROWS, 128) f32 --------------------
SLAB_W = 128
R_PATCH_W = 0                          # (192, 32) patch-embedding weight
R_BASE = R_PATCH_W + PATCH_DIM         # (8, 32)   class_emb + positional embeddings
R_PRE_G = R_BASE + S_PAD               # (1, 32)   pre-layernorm gamma
R_PRE_B = R_PRE_G + 1                  # (1, 32)   pre-layernorm beta
R_HEAD_W = R_PRE_B + 1                 # (1, 32)   post_ln . visual_projection . fc (folded, transposed)
R_HEAD_B = R_HEAD_W + 1                # (1, 1)    folded head bias
R_LAYER0 = ((R_HEAD_B + 1 + 7) // 8) * 8          # 208, 8-row aligned
# per-layer block offsets (all matrix starts are multiples of 8 sublanes)
LO_QKV_W = 0                           # (32, 96)  [ln1 affine + attention scale folded]
LO_QKV_B = 32                          # (1, 96)
LO_O_W = 40                            # (32, 32)  rows [h*16, (h+1)*16) belong to head h
LO_O_B = 72                            # (1, 32)
LO_FC1_W = 80                          # (32, 64)  [ln2 affine folded]
LO_FC1_B = 112                         # (1, 64)
LO_FC2_W = 120                         # (64, 32)
LO_FC2_B = 184                         # (1, 32)
LAYER_ROWS = 192
SLAB_ROWS = R_LAYER0 + LAYERS * LAYER_ROWS        # 592 rows -> 296 KiB f32


# ----------------------------- fused Pallas kernel -----------------------------

def _ln(x, g=None, b=None):
    """LayerNorm over the (real, 32-wide) feature axis.

    Two-moment form so the two cross-lane reductions are independent; the affine is
    omitted whenever it has been folded into the following matmul offline.
    """
    m1 = jnp.mean(x, axis=-1, keepdims=True)
    m2 = jnp.mean(x * x, axis=-1, keepdims=True)
    y = (x - m1) * jax.lax.rsqrt((m2 - m1 * m1) + LN_EPS)
    if g is not None:
        y = y * g + b
    return y


def _fused_forward_kernel(patches_ref, slab_ref, out_ref):
    f32 = jnp.float32
    rows = patches_ref.shape[0]          # B * S_PAD
    batch = rows // S_PAD

    # ---- parameter views: static, sublane-aligned slices of the single packed slab ----
    patch_w = slab_ref[R_PATCH_W:R_PATCH_W + PATCH_DIM, 0:HIDDEN]
    base = slab_ref[R_BASE:R_BASE + S_PAD, 0:HIDDEN]
    pre_g = slab_ref[R_PRE_G:R_PRE_G + 1, 0:HIDDEN]
    pre_b = slab_ref[R_PRE_B:R_PRE_B + 1, 0:HIDDEN]
    head_wt = slab_ref[R_HEAD_W:R_HEAD_W + 1, 0:HIDDEN]
    head_b = slab_ref[R_HEAD_B:R_HEAD_B + 1, 0:1]

    # ---- patch embedding + class/positional embeddings + CLIP pre-layernorm ----
    # Rows 0 and SEQ..S_PAD-1 of each image's 8-row slot are zero (CLS slot / padding),
    # so they embed to zero; `base` supplies class_emb + pos_emb (zero on pad rows).
    if batch > 1:
        base = jnp.concatenate([base] * batch, axis=0)          # (rows, HIDDEN)
    x = jnp.dot(patches_ref[...], patch_w, preferred_element_type=f32) + base
    x = _ln(x, pre_g, pre_b)

    # Block-diagonal additive attention bias: a query only sees keys of its own image,
    # and only the SEQ real token positions (pad key slots are masked out).
    row_id = jax.lax.broadcasted_iota(jnp.int32, (rows, rows), 0)
    col_id = jax.lax.broadcasted_iota(jnp.int32, (rows, rows), 1)
    same_img = (row_id >> S_SHIFT) == (col_id >> S_SHIFT)
    real_key = (col_id & (S_PAD - 1)) < SEQ
    key_mask = jnp.where(same_img & real_key, 0.0, -1e30).astype(f32)

    for l in range(LAYERS):                                      # static unroll
        lr = R_LAYER0 + l * LAYER_ROWS

        # ---- self-attention (ln1 affine + attention scale folded into qkv offline) ----
        h = _ln(x)
        qkv_w = slab_ref[lr + LO_QKV_W:lr + LO_QKV_W + HIDDEN, :]       # (32, 128)
        qkv_b = slab_ref[lr + LO_QKV_B:lr + LO_QKV_B + 1, :]            # (1, 128)
        qkv = jnp.dot(h, qkv_w, preferred_element_type=f32) + qkv_b     # (rows, 128)
        attn = None
        for hd in range(HEADS):                                  # static lane slices
            q = qkv[:, hd * HEAD_DIM:(hd + 1) * HEAD_DIM]        # scale already folded
            k = qkv[:, HIDDEN + hd * HEAD_DIM:HIDDEN + (hd + 1) * HEAD_DIM]
            v = qkv[:, 2 * HIDDEN + hd * HEAD_DIM:2 * HIDDEN + (hd + 1) * HEAD_DIM]
            s = jax.lax.dot_general(q, k, (((1,), (1,)), ((), ())),
                                    preferred_element_type=f32) + key_mask
            m = jnp.max(s, axis=-1, keepdims=True)
            p = jnp.exp(s - m)
            denom = jnp.sum(p, axis=-1, keepdims=True)
            if APPROX_SOFTMAX_RECIPROCAL:
                p = p * pl.reciprocal(denom, approx=True)
            else:
                p = p / denom
            ho = jnp.dot(p, v, preferred_element_type=f32)       # (rows, HEAD_DIM)
            # accumulate straight into the out-projection (no lane concatenate)
            o_w_h = slab_ref[lr + LO_O_W + hd * HEAD_DIM:
                             lr + LO_O_W + (hd + 1) * HEAD_DIM, 0:HIDDEN]
            part = jnp.dot(ho, o_w_h, preferred_element_type=f32)
            attn = part if attn is None else attn + part
        o_b = slab_ref[lr + LO_O_B:lr + LO_O_B + 1, 0:HIDDEN]
        x = x + attn + o_b

        # ---- MLP block (ln2 affine folded into fc1 offline, QuickGELU) ----
        h = _ln(x)
        fc1_w = slab_ref[lr + LO_FC1_W:lr + LO_FC1_W + HIDDEN, 0:INTERMEDIATE]
        fc1_b = slab_ref[lr + LO_FC1_B:lr + LO_FC1_B + 1, 0:INTERMEDIATE]
        fc2_w = slab_ref[lr + LO_FC2_W:lr + LO_FC2_W + INTERMEDIATE, 0:HIDDEN]
        fc2_b = slab_ref[lr + LO_FC2_B:lr + LO_FC2_B + 1, 0:HIDDEN]
        h = jnp.dot(h, fc1_w, preferred_element_type=f32) + fc1_b
        h = h * jax.nn.sigmoid(1.702 * h)                        # QuickGELU
        h = jnp.dot(h, fc2_w, preferred_element_type=f32) + fc2_b
        x = x + h

    # ---- CLS tokens -> (folded) post-LN + projection + fc head -> sigmoid*9+1 ----
    cls = jnp.concatenate([x[b * S_PAD:b * S_PAD + 1, :] for b in range(batch)], axis=0)
    cls = _ln(cls)                                               # affine folded into head
    logit = jnp.sum(cls * head_wt, axis=-1, keepdims=True) + head_b     # (batch, 1)
    out_ref[...] = jax.nn.sigmoid(logit) * 9.0 + 1.0


def aesthetic_predictor(params, image):
    """image: (B, C, H, W) float NCHW -> aesthetic scores, shape (B,), values in (1, 10)."""
    B, C, H, W = image.shape
    gh, gw = H // PATCH, W // PATCH
    # Patch-embedding conv (kernel = stride = patch, no bias) == matmul over flattened
    # patches; (C, ph, pw) feature order matches the PyTorch conv-weight flattening.
    patches = (image.astype(jnp.float32)
               .reshape(B, C, gh, PATCH, gw, PATCH)
               .transpose(0, 2, 4, 1, 3, 5)
               .reshape(B, gh * gw, PATCH_DIM))
    # One zero row in front (CLS slot) and S_PAD-SEQ zero rows behind (sublane padding),
    # then fold batch into sublanes: a single (B*8, 192) activation slab, one kernel call.
    patches = jnp.pad(patches, ((0, 0), (1, S_PAD - SEQ), (0, 0)))
    patches = patches.reshape(B * S_PAD, PATCH_DIM)

    out = pl.pallas_call(
        _fused_forward_kernel,
        out_shape=jax.ShapeDtypeStruct((B, 1), jnp.float32),
        # No grid: the whole problem (<1 MiB) runs in one shot with everything VMEM-resident.
        in_specs=[pl.BlockSpec(memory_space=pltpu.MemorySpace.VMEM),
                  pl.BlockSpec(memory_space=pltpu.MemorySpace.VMEM)],
        out_specs=pl.BlockSpec(memory_space=pltpu.MemorySpace.VMEM),
    )(patches, params["slab"])
    return jnp.squeeze(out)                                      # score.squeeze()


# ----------------------------- deterministic parameter init -----------------------------

def init_params(key):
    """Create synthetic CLIP-like weights, fold them offline, pack into one (592,128) slab."""
    keys = iter(jax.random.split(key, 32))

    def nrm(shape, scale=0.02):
        return (scale * jax.random.normal(next(keys), shape)).astype(jnp.float32)

    zeros = functools.partial(jnp.zeros, dtype=jnp.float32)
    ones = functools.partial(jnp.ones, dtype=jnp.float32)

    # ---- raw (PyTorch-layout) weights ----
    patch_w = nrm((PATCH_DIM, HIDDEN))
    class_emb = nrm((HIDDEN,))
    pos_emb = nrm((SEQ, HIDDEN))
    pre_g, pre_b = ones((HIDDEN,)), zeros((HIDDEN,))
    post_g, post_b = ones((HIDDEN,)), zeros((HIDDEN,))
    proj_w = nrm((HIDDEN, PROJ_DIM))        # visual_projection (no bias)
    fc_w = nrm((PROJ_DIM, 1))               # nn.Linear(512, 1), stored (in, out)
    fc_b = zeros((1,))

    layers = []
    for _ in range(LAYERS):
        layers.append(dict(
            ln1_g=ones((HIDDEN,)), ln1_b=zeros((HIDDEN,)),
            q_w=nrm((HIDDEN, HIDDEN)), q_b=zeros((HIDDEN,)),
            k_w=nrm((HIDDEN, HIDDEN)), k_b=zeros((HIDDEN,)),
            v_w=nrm((HIDDEN, HIDDEN)), v_b=zeros((HIDDEN,)),
            o_w=nrm((HIDDEN, HIDDEN)), o_b=zeros((HIDDEN,)),
            ln2_g=ones((HIDDEN,)), ln2_b=zeros((HIDDEN,)),
            fc1_w=nrm((HIDDEN, INTERMEDIATE)), fc1_b=zeros((INTERMEDIATE,)),
            fc2_w=nrm((INTERMEDIATE, HIDDEN)), fc2_b=zeros((HIDDEN,)),
        ))

    # ---- one-time offline algebraic folding + packing into one lane-dense slab ----
    slab = zeros((SLAB_ROWS, SLAB_W))

    def put(s, row, mat):
        mat = jnp.asarray(mat, jnp.float32)
        if mat.ndim == 1:
            mat = mat[None, :]
        return s.at[row:row + mat.shape[0], 0:mat.shape[1]].set(mat)

    slab = put(slab, R_PATCH_W, patch_w)

    base = zeros((S_PAD, HIDDEN)).at[0, :].set(class_emb).at[:SEQ, :].add(pos_emb)
    slab = put(slab, R_BASE, base)
    slab = put(slab, R_PRE_G, pre_g)
    slab = put(slab, R_PRE_B, pre_b)

    # post_layernorm . visual_projection . fc folded into a single (HIDDEN,) vector + scalar
    head_full = proj_w @ fc_w                                    # (HIDDEN, 1)
    slab = put(slab, R_HEAD_W, (post_g[:, None] * head_full)[:, 0])
    slab = put(slab, R_HEAD_B, post_b @ head_full + fc_b)

    for l, lp in enumerate(layers):
        lr = R_LAYER0 + l * LAYER_ROWS
        # fold attention scale into q columns, then ln1 affine into the fused qkv matmul
        w1 = jnp.concatenate([lp["q_w"] * ATTN_SCALE, lp["k_w"], lp["v_w"]], axis=1)
        b1 = jnp.concatenate([lp["q_b"] * ATTN_SCALE, lp["k_b"], lp["v_b"]])
        slab = put(slab, lr + LO_QKV_W, lp["ln1_g"][:, None] * w1)
        slab = put(slab, lr + LO_QKV_B, lp["ln1_b"] @ w1 + b1)
        slab = put(slab, lr + LO_O_W, lp["o_w"])
        slab = put(slab, lr + LO_O_B, lp["o_b"])
        # fold ln2 affine into fc1
        slab = put(slab, lr + LO_FC1_W, lp["ln2_g"][:, None] * lp["fc1_w"])
        slab = put(slab, lr + LO_FC1_B, lp["ln2_b"] @ lp["fc1_w"] + lp["fc1_b"])
        slab = put(slab, lr + LO_FC2_W, lp["fc2_w"])
        slab = put(slab, lr + LO_FC2_B, lp["fc2_b"])

    return {"slab": slab}


# ----------------------------- run -----------------------------

if __name__ == "__main__":
    key = jax.random.PRNGKey(0)
    pkey, xkey = jax.random.split(key)

    params = init_params(pkey)
    # NCHW image batch, as CLIPVisionModel expects: batch=2, channels=3, spatial 16x16
    image = jax.random.normal(xkey, (2, CHANNELS, IMG, IMG), dtype=jnp.float32)

    scores = jax.block_until_ready(jax.jit(aesthetic_predictor)(params, image))

    assert scores.shape == (2,)
    # sigmoid(.)*9 + 1 lies strictly in (1, 10)
    assert bool(jnp.all((scores > 1.0) & (scores < 10.0)))
    print("KERNEL_OK")
</pallas_src>

<mosaic_0001>
module attributes {stable_mosaic.version = 11 : i64} {
  func.func @_fused_forward_kernel(%arg0: memref<16x192xf32, #tpu.memory_space<vmem>>, %arg1: memref<592x128xf32, #tpu.memory_space<vmem>>, %arg2: memref<2x1xf32, #tpu.memory_space<vmem>>) attributes {dimension_semantics = [], scalar_prefetch = 0 : i64, scratch_operands = 0 : i64, tpu.core_type = #tpu.core_type<tc>} {
    %c0 = arith.constant 0 : index
    %c0_0 = arith.constant 0 : index
    %0 = vector.load %arg1[%c0, %c0_0] : memref<592x128xf32, #tpu.memory_space<vmem>>, vector<192x32xf32>
    %c192 = arith.constant 192 : index
    %c0_1 = arith.constant 0 : index
    %1 = vector.load %arg1[%c192, %c0_1] : memref<592x128xf32, #tpu.memory_space<vmem>>, vector<8x32xf32>
    %c200 = arith.constant 200 : index
    %c0_2 = arith.constant 0 : index
    %2 = vector.load %arg1[%c200, %c0_2] : memref<592x128xf32, #tpu.memory_space<vmem>>, vector<1x32xf32>
    %c201 = arith.constant 201 : index
    %c0_3 = arith.constant 0 : index
    %3 = vector.load %arg1[%c201, %c0_3] : memref<592x128xf32, #tpu.memory_space<vmem>>, vector<1x32xf32>
    %c202 = arith.constant 202 : index
    %c0_4 = arith.constant 0 : index
    %4 = vector.load %arg1[%c202, %c0_4] : memref<592x128xf32, #tpu.memory_space<vmem>>, vector<1x32xf32>
    %c203 = arith.constant 203 : index
    %c0_5 = arith.constant 0 : index
    %5 = vector.load %arg1[%c203, %c0_5] : memref<592x128xf32, #tpu.memory_space<vmem>>, vector<1x1xf32>
    %6 = tpu.concatenate %1, %1 in 0 : vector<8x32xf32>, vector<8x32xf32> -> vector<16x32xf32>
    %c0_6 = arith.constant 0 : index
    %c0_7 = arith.constant 0 : index
    %7 = vector.load %arg0[%c0_6, %c0_7] : memref<16x192xf32, #tpu.memory_space<vmem>>, vector<16x192xf32>
    %cst = arith.constant dense<0.000000e+00> : vector<16x32xf32>
    %8 = tpu.matmul %7, %0, %cst {dimension_numbers = #tpu.dot_dimension_numbers<[1], [0], [0], [1], [0, 0, 1, 1], [], []>} : vector<16x192xf32>, vector<192x32xf32>, vector<16x32xf32> -> vector<16x32xf32>
    %9 = arith.addf %8, %6 : vector<16x32xf32>
    %cst_8 = arith.constant dense<0.000000e+00> : vector<16xf32>
    %10 = vector.multi_reduction <add>, %9, %cst_8 [1] : vector<16x32xf32> to vector<16xf32>
    %11 = vector.shape_cast %10 : vector<16xf32> to vector<16x1xf32>
    %cst_9 = arith.constant 3.200000e+01 : f32
    %12 = vector.broadcast %cst_9 : f32 to vector<16x1xf32>
    %13 = arith.divf %11, %12 : vector<16x1xf32>
    %14 = arith.mulf %9, %9 : vector<16x32xf32>
    %cst_10 = arith.constant dense<0.000000e+00> : vector<16xf32>
    %15 = vector.multi_reduction <add>, %14, %cst_10 [1] : vector<16x32xf32> to vector<16xf32>
    %16 = vector.shape_cast %15 : vector<16xf32> to vector<16x1xf32>
    %cst_11 = arith.constant 3.200000e+01 : f32
    %17 = vector.broadcast %cst_11 : f32 to vector<16x1xf32>
    %18 = arith.divf %16, %17 : vector<16x1xf32>
    %19 = vector.broadcast %13 : vector<16x1xf32> to vector<16x32xf32>
    %20 = arith.subf %9, %19 : vector<16x32xf32>
    %21 = arith.mulf %13, %13 : vector<16x1xf32>
    %22 = arith.subf %18, %21 : vector<16x1xf32>
    %cst_12 = arith.constant 9.99999974E-6 : f32
    %23 = vector.broadcast %cst_12 : f32 to vector<16x1xf32>
    %24 = arith.addf %22, %23 : vector<16x1xf32>
    %25 = math.rsqrt %24 : vector<16x1xf32>
    %26 = vector.broadcast %25 : vector<16x1xf32> to vector<16x32xf32>
    %27 = arith.mulf %20, %26 : vector<16x32xf32>
    %28 = vector.broadcast %2 : vector<1x32xf32> to vector<16x32xf32>
    %29 = arith.mulf %27, %28 : vector<16x32xf32>
    %30 = vector.broadcast %3 : vector<1x32xf32> to vector<16x32xf32>
    %31 = arith.addf %29, %30 : vector<16x32xf32>
    %32 = tpu.iota {dimensions = array<i32: 0>} : vector<16x16xi32>
    %33 = tpu.iota {dimensions = array<i32: 1>} : vector<16x16xi32>
    %c3_i32 = arith.constant 3 : i32
    %34 = vector.broadcast %c3_i32 : i32 to vector<16x16xi32>
    %35 = arith.shrsi %32, %34 : vector<16x16xi32>
    %c3_i32_13 = arith.constant 3 : i32
    %36 = vector.broadcast %c3_i32_13 : i32 to vector<16x16xi32>
    %37 = arith.shrsi %33, %36 : vector<16x16xi32>
    %38 = arith.cmpi eq, %35, %37 : vector<16x16xi32>
    %c7_i32 = arith.constant 7 : i32
    %39 = vector.broadcast %c7_i32 : i32 to vector<16x16xi32>
    %40 = arith.andi %33, %39 : vector<16x16xi32>
    %c5_i32 = arith.constant 5 : i32
    %41 = vector.broadcast %c5_i32 : i32 to vector<16x16xi32>
    %42 = arith.cmpi slt, %40, %41 : vector<16x16xi32>
    %43 = arith.andi %38, %42 : vector<16x16xi1>
    %cst_14 = arith.constant 0.000000e+00 : f32
    %cst_15 = arith.constant -1.000000e+30 : f32
    %44 = vector.broadcast %cst_14 : f32 to vector<16x16xf32>
    %45 = vector.broadcast %cst_15 : f32 to vector<16x16xf32>
    %46 = arith.select %43, %44, %45 : vector<16x16xi1>, vector<16x16xf32>
    %cst_16 = arith.constant dense<0.000000e+00> : vector<16xf32>
    %47 = vector.multi_reduction <add>, %31, %cst_16 [1] : vector<16x32xf32> to vector<16xf32>
    %48 = vector.shape_cast %47 : vector<16xf32> to vector<16x1xf32>
    %cst_17 = arith.constant 3.200000e+01 : f32
    %49 = vector.broadcast %cst_17 : f32 to vector<16x1xf32>
    %50 = arith.divf %48, %49 : vector<16x1xf32>
    %51 = arith.mulf %31, %31 : vector<16x32xf32>
    %cst_18 = arith.constant dense<0.000000e+00> : vector<16xf32>
    %52 = vector.multi_reduction <add>, %51, %cst_18 [1] : vector<16x32xf32> to vector<16xf32>
    %53 = vector.shape_cast %52 : vector<16xf32> to vector<16x1xf32>
    %cst_19 = arith.constant 3.200000e+01 : f32
    %54 = vector.broadcast %cst_19 : f32 to vector<16x1xf32>
    %55 = arith.divf %53, %54 : vector<16x1xf32>
    %56 = vector.broadcast %50 : vector<16x1xf32> to vector<16x32xf32>
    %57 = arith.subf %31, %56 : vector<16x32xf32>
    %58 = arith.mulf %50, %50 : vector<16x1xf32>
    %59 = arith.subf %55, %58 : vector<16x1xf32>
    %cst_20 = arith.constant 9.99999974E-6 : f32
    %60 = vector.broadcast %cst_20 : f32 to vector<16x1xf32>
    %61 = arith.addf %59, %60 : vector<16x1xf32>
    %62 = math.rsqrt %61 : vector<16x1xf32>
    %63 = vector.broadcast %62 : vector<16x1xf32> to vector<16x32xf32>
    %64 = arith.mulf %57, %63 : vector<16x32xf32>
    %c208 = arith.constant 208 : index
    %c0_21 = arith.constant 0 : index
    %65 = vector.load %arg1[%c208, %c0_21] : memref<592x128xf32, #tpu.memory_space<vmem>>, vector<32x128xf32>
    %c240 = arith.constant 240 : index
    %c0_22 = arith.constant 0 : index
    %66 = vector.load %arg1[%c240, %c0_22] : memref<592x128xf32, #tpu.memory_space<vmem>>, vector<1x128xf32>
    %cst_23 = arith.constant dense<0.000000e+00> : vector<16x128xf32>
    %67 = tpu.matmul %64, %65, %cst_23 {dimension_numbers = #tpu.dot_dimension_numbers<[1], [0], [0], [1], [0, 0, 1, 1], [], []>} : vector<16x32xf32>, vector<32x128xf32>, vector<16x128xf32> -> vector<16x128xf32>
    %68 = vector.broadcast %66 : vector<1x128xf32> to vector<16x128xf32>
    %69 = arith.addf %67, %68 : vector<16x128xf32>
    %70 = vector.extract_strided_slice %69 {offsets = [0, 0], sizes = [16, 16], strides = [1, 1]} : vector<16x128xf32> to vector<16x16xf32>
    %71 = vector.extract_strided_slice %69 {offsets = [0, 32], sizes = [16, 16], strides = [1, 1]} : vector<16x128xf32> to vector<16x16xf32>
    %72 = vector.extract_strided_slice %69 {offsets = [0, 64], sizes = [16, 16], strides = [1, 1]} : vector<16x128xf32> to vector<16x16xf32>
    %cst_24 = arith.constant dense<0.000000e+00> : vector<16x16xf32>
    %73 = tpu.matmul %70, %71, %cst_24 {dimension_numbers = #tpu.dot_dimension_numbers<[1], [1], [0], [0], [0, 0, 1, 0], [], []>} : vector<16x16xf32>, vector<16x16xf32>, vector<16x16xf32> -> vector<16x16xf32>
    %74 = arith.addf %73, %46 : vector<16x16xf32>
    %cst_25 = arith.constant dense<0xFF800000> : vector<16xf32>
    %75 = vector.multi_reduction <maximumf>, %74, %cst_25 [1] : vector<16x16xf32> to vector<16xf32>
    %76 = vector.shape_cast %75 : vector<16xf32> to vector<16x1xf32>
    %77 = vector.broadcast %76 : vector<16x1xf32> to vector<16x16xf32>
    %78 = arith.subf %74, %77 : vector<16x16xf32>
    %79 = math.exp %78 : vector<16x16xf32>
    %cst_26 = arith.constant dense<0.000000e+00> : vector<16xf32>
    %80 = vector.multi_reduction <add>, %79, %cst_26 [1] : vector<16x16xf32> to vector<16xf32>
    %81 = vector.shape_cast %80 : vector<16xf32> to vector<16x1xf32>
    %82 = tpu.reciprocal %81 {approx = true} : vector<16x1xf32> -> vector<16x1xf32>
    %83 = vector.broadcast %82 : vector<16x1xf32> to vector<16x16xf32>
    %84 = arith.mulf %79, %83 : vector<16x16xf32>
    %cst_27 = arith.constant dense<0.000000e+00> : vector<16x16xf32>
    %85 = tpu.matmul %84, %72, %cst_27 {dimension_numbers = #tpu.dot_dimension_numbers<[1], [0], [0], [1], [0, 0, 1, 1], [], []>} : vector<16x16xf32>, vector<16x16xf32>, vector<16x16xf32> -> vector<16x16xf32>
    %c248 = arith.constant 248 : index
    %c0_28 = arith.constant 0 : index
    %86 = vector.load %arg1[%c248, %c0_28] : memref<592x128xf32, #tpu.memory_space<vmem>>, vector<16x32xf32>
    %cst_29 = arith.constant dense<0.000000e+00> : vector<16x32xf32>
    %87 = tpu.matmul %85, %86, %cst_29 {dimension_numbers = #tpu.dot_dimension_numbers<[1], [0], [0], [1], [0, 0, 1, 1], [], []>} : vector<16x16xf32>, vector<16x32xf32>, vector<16x32xf32> -> vector<16x32xf32>
    %88 = vector.extract_strided_slice %69 {offsets = [0, 16], sizes = [16, 16], strides = [1, 1]} : vector<16x128xf32> to vector<16x16xf32>
    %89 = vector.extract_strided_slice %69 {offsets = [0, 48], sizes = [16, 16], strides = [1, 1]} : vector<16x128xf32> to vector<16x16xf32>
    %90 = vector.extract_strided_slice %69 {offsets = [0, 80], sizes = [16, 16], strides = [1, 1]} : vector<16x128xf32> to vector<16x16xf32>
    %cst_30 = arith.constant dense<0.000000e+00> : vector<16x16xf32>
    %91 = tpu.matmul %88, %89, %cst_30 {dimension_numbers = #tpu.dot_dimension_numbers<[1], [1], [0], [0], [0, 0, 1, 0], [], []>} : vector<16x16xf32>, vector<16x16xf32>, vector<16x16xf32> -> vector<16x16xf32>
    %92 = arith.addf %91, %46 : vector<16x16xf32>
    %cst_31 = arith.constant dense<0xFF800000> : vector<16xf32>
    %93 = vector.multi_reduction <maximumf>, %92, %cst_31 [1] : vector<16x16xf32> to vector<16xf32>
    %94 = vector.shape_cast %93 : vector<16xf32> to vector<16x1xf32>
    %95 = vector.broadcast %94 : vector<16x1xf32> to vector<16x16xf32>
    %96 = arith.subf %92, %95 : vector<16x16xf32>
    %97 = math.exp %96 : vector<16x16xf32>
    %cst_32 = arith.constant dense<0.000000e+00> : vector<16xf32>
    %98 = vector.multi_reduction <add>, %97, %cst_32 [1] : vector<16x16xf32> to vector<16xf32>
    %99 = vector.shape_cast %98 : vector<16xf32> to vector<16x1xf32>
    %100 = tpu.reciprocal %99 {approx = true} : vector<16x1xf32> -> vector<16x1xf32>
    %101 = vector.broadcast %100 : vector<16x1xf32> to vector<16x16xf32>
    %102 = arith.mulf %97, %101 : vector<16x16xf32>
    %cst_33 = arith.constant dense<0.000000e+00> : vector<16x16xf32>
    %103 = tpu.matmul %102, %90, %cst_33 {dimension_numbers = #tpu.dot_dimension_numbers<[1], [0], [0], [1], [0, 0, 1, 1], [], []>} : vector<16x16xf32>, vector<16x16xf32>, vector<16x16xf32> -> vector<16x16xf32>
    %c264 = arith.constant 264 : index
    %c0_34 = arith.constant 0 : index
    %104 = vector.load %arg1[%c264, %c0_34] : memref<592x128xf32, #tpu.memory_space<vmem>>, vector<16x32xf32>
    %cst_35 = arith.constant dense<0.000000e+00> : vector<16x32xf32>
    %105 = tpu.matmul %103, %104, %cst_35 {dimension_numbers = #tpu.dot_dimension_numbers<[1], [0], [0], [1], [0, 0, 1, 1], [], []>} : vector<16x16xf32>, vector<16x32xf32>, vector<16x32xf32> -> vector<16x32xf32>
    %106 = arith.addf %87, %105 : vector<16x32xf32>
    %c280 = arith.constant 280 : index
    %c0_36 = arith.constant 0 : index
    %107 = vector.load %arg1[%c280, %c0_36] : memref<592x128xf32, #tpu.memory_space<vmem>>, vector<1x32xf32>
    %108 = arith.addf %31, %106 : vector<16x32xf32>
    %109 = vector.broadcast %107 : vector<1x32xf32> to vector<16x32xf32>
    %110 = arith.addf %108, %109 : vector<16x32xf32>
    %cst_37 = arith.constant dense<0.000000e+00> : vector<16xf32>
    %111 = vector.multi_reduction <add>, %110, %cst_37 [1] : vector<16x32xf32> to vector<16xf32>
    %112 = vector.shape_cast %111 : vector<16xf32> to vector<16x1xf32>
    %cst_38 = arith.constant 3.200000e+01 : f32
    %113 = vector.broadcast %cst_38 : f32 to vector<16x1xf32>
    %114 = arith.divf %112, %113 : vector<16x1xf32>
    %115 = arith.mulf %110, %110 : vector<16x32xf32>
    %cst_39 = arith.constant dense<0.000000e+00> : vector<16xf32>
    %116 = vector.multi_reduction <add>, %115, %cst_39 [1] : vector<16x32xf32> to vector<16xf32>
    %117 = vector.shape_cast %116 : vector<16xf32> to vector<16x1xf32>
    %cst_40 = arith.constant 3.200000e+01 : f32
    %118 = vector.broadcast %cst_40 : f32 to vector<16x1xf32>
    %119 = arith.divf %117, %118 : vector<16x1xf32>
    %120 = vector.broadcast %114 : vector<16x1xf32> to vector<16x32xf32>
    %121 = arith.subf %110, %120 : vector<16x32xf32>
    %122 = arith.mulf %114, %114 : vector<16x1xf32>
    %123 = arith.subf %119, %122 : vector<16x1xf32>
    %cst_41 = arith.constant 9.99999974E-6 : f32
    %124 = vector.broadcast %cst_41 : f32 to vector<16x1xf32>
    %125 = arith.addf %123, %124 : vector<16x1xf32>
    %126 = math.rsqrt %125 : vector<16x1xf32>
    %127 = vector.broadcast %126 : vector<16x1xf32> to vector<16x32xf32>
    %128 = arith.mulf %121, %127 : vector<16x32xf32>
    %c288 = arith.constant 288 : index
    %c0_42 = arith.constant 0 : index
    %129 = vector.load %arg1[%c288, %c0_42] : memref<592x128xf32, #tpu.memory_space<vmem>>, vector<32x64xf32>
    %c320 = arith.constant 320 : index
    %c0_43 = arith.constant 0 : index
    %130 = vector.load %arg1[%c320, %c0_43] : memref<592x128xf32, #tpu.memory_space<vmem>>, vector<1x64xf32>
    %c328 = arith.constant 328 : index
    %c0_44 = arith.constant 0 : index
    %131 = vector.load %arg1[%c328, %c0_44] : memref<592x128xf32, #tpu.memory_space<vmem>>, vector<64x32xf32>
    %c392 = arith.constant 392 : index
    %c0_45 = arith.constant 0 : index
    %132 = vector.load %arg1[%c392, %c0_45] : memref<592x128xf32, #tpu.memory_space<vmem>>, vector<1x32xf32>
    %cst_46 = arith.constant dense<0.000000e+00> : vector<16x64xf32>
    %133 = tpu.matmul %128, %129, %cst_46 {dimension_numbers = #tpu.dot_dimension_numbers<[1], [0], [0], [1], [0, 0, 1, 1], [], []>} : vector<16x32xf32>, vector<32x64xf32>, vector<16x64xf32> -> vector<16x64xf32>
    %134 = vector.broadcast %130 : vector<1x64xf32> to vector<16x64xf32>
    %135 = arith.addf %133, %134 : vector<16x64xf32>
    %cst_47 = arith.constant 1.702000e+00 : f32
    %136 = vector.broadcast %cst_47 : f32 to vector<16x64xf32>
    %137 = arith.mulf %136, %135 : vector<16x64xf32>
    %138 = arith.negf %137 : vector<16x64xf32>
    %139 = math.exp %138 : vector<16x64xf32>
    %cst_48 = arith.constant 1.000000e+00 : f32
    %140 = vector.broadcast %cst_48 : f32 to vector<16x64xf32>
    %141 = arith.addf %140, %139 : vector<16x64xf32>
    %142 = arith.divf %140, %141 : vector<16x64xf32>
    %143 = arith.mulf %135, %142 : vector<16x64xf32>
    %cst_49 = arith.constant dense<0.000000e+00> : vector<16x32xf32>
    %144 = tpu.matmul %143, %131, %cst_49 {dimension_numbers = #tpu.dot_dimension_numbers<[1], [0], [0], [1], [0, 0, 1, 1], [], []>} : vector<16x64xf32>, vector<64x32xf32>, vector<16x32xf32> -> vector<16x32xf32>
    %145 = vector.broadcast %132 : vector<1x32xf32> to vector<16x32xf32>
    %146 = arith.addf %144, %145 : vector<16x32xf32>
    %147 = arith.addf %110, %146 : vector<16x32xf32>
    %cst_50 = arith.constant dense<0.000000e+00> : vector<16xf32>
    %148 = vector.multi_reduction <add>, %147, %cst_50 [1] : vector<16x32xf32> to vector<16xf32>
    %149 = vector.shape_cast %148 : vector<16xf32> to vector<16x1xf32>
    %cst_51 = arith.constant 3.200000e+01 : f32
    %150 = vector.broadcast %cst_51 : f32 to vector<16x1xf32>
    %151 = arith.divf %149, %150 : vector<16x1xf32>
    %152 = arith.mulf %147, %147 : vector<16x32xf32>
    %cst_52 = arith.constant dense<0.000000e+00> : vector<16xf32>
    %153 = vector.multi_reduction <add>, %152, %cst_52 [1] : vector<16x32xf32> to vector<16xf32>
    %154 = vector.shape_cast %153 : vector<16xf32> to vector<16x1xf32>
    %cst_53 = arith.constant 3.200000e+01 : f32
    %155 = vector.broadcast %cst_53 : f32 to vector<16x1xf32>
    %156 = arith.divf %154, %155 : vector<16x1xf32>
    %157 = vector.broadcast %151 : vector<16x1xf32> to vector<16x32xf32>
    %158 = arith.subf %147, %157 : vector<16x32xf32>
    %159 = arith.mulf %151, %151 : vector<16x1xf32>
    %160 = arith.subf %156, %159 : vector<16x1xf32>
    %cst_54 = arith.constant 9.99999974E-6 : f32
    %161 = vector.broadcast %cst_54 : f32 to vector<16x1xf32>
    %162 = arith.addf %160, %161 : vector<16x1xf32>
    %163 = math.rsqrt %162 : vector<16x1xf32>
    %164 = vector.broadcast %163 : vector<16x1xf32> to vector<16x32xf32>
    %165 = arith.mulf %158, %164 : vector<16x32xf32>
    %c400 = arith.constant 400 : index
    %c0_55 = arith.constant 0 : index
    %166 = vector.load %arg1[%c400, %c0_55] : memref<592x128xf32, #tpu.memory_space<vmem>>, vector<32x128xf32>
    %c432 = arith.constant 432 : index
    %c0_56 = arith.constant 0 : index
    %167 = vector.load %arg1[%c432, %c0_56] : memref<592x128xf32, #tpu.memory_space<vmem>>, vector<1x128xf32>
    %cst_57 = arith.constant dense<0.000000e+00> : vector<16x128xf32>
    %168 = tpu.matmul %165, %166, %cst_57 {dimension_numbers = #tpu.dot_dimension_numbers<[1], [0], [0], [1], [0, 0, 1, 1], [], []>} : vector<16x32xf32>, vector<32x128xf32>, vector<16x128xf32> -> vector<16x128xf32>
    %169 = vector.broadcast %167 : vector<1x128xf32> to vector<16x128xf32>
    %170 = arith.addf %168, %169 : vector<16x128xf32>
    %171 = vector.extract_strided_slice %170 {offsets = [0, 0], sizes = [16, 16], strides = [1, 1]} : vector<16x128xf32> to vector<16x16xf32>
    %172 = vector.extract_strided_slice %170 {offsets = [0, 32], sizes = [16, 16], strides = [1, 1]} : vector<16x128xf32> to vector<16x16xf32>
    %173 = vector.extract_strided_slice %170 {offsets = [0, 64], sizes = [16, 16], strides = [1, 1]} : vector<16x128xf32> to vector<16x16xf32>
    %cst_58 = arith.constant dense<0.000000e+00> : vector<16x16xf32>
    %174 = tpu.matmul %171, %172, %cst_58 {dimension_numbers = #tpu.dot_dimension_numbers<[1], [1], [0], [0], [0, 0, 1, 0], [], []>} : vector<16x16xf32>, vector<16x16xf32>, vector<16x16xf32> -> vector<16x16xf32>
    %175 = arith.addf %174, %46 : vector<16x16xf32>
    %cst_59 = arith.constant dense<0xFF800000> : vector<16xf32>
    %176 = vector.multi_reduction <maximumf>, %175, %cst_59 [1] : vector<16x16xf32> to vector<16xf32>
    %177 = vector.shape_cast %176 : vector<16xf32> to vector<16x1xf32>
    %178 = vector.broadcast %177 : vector<16x1xf32> to vector<16x16xf32>
    %179 = arith.subf %175, %178 : vector<16x16xf32>
    %180 = math.exp %179 : vector<16x16xf32>
    %cst_60 = arith.constant dense<0.000000e+00> : vector<16xf32>
    %181 = vector.multi_reduction <add>, %180, %cst_60 [1] : vector<16x16xf32> to vector<16xf32>
    %182 = vector.shape_cast %181 : vector<16xf32> to vector<16x1xf32>
    %183 = tpu.reciprocal %182 {approx = true} : vector<16x1xf32> -> vector<16x1xf32>
    %184 = vector.broadcast %183 : vector<16x1xf32> to vector<16x16xf32>
    %185 = arith.mulf %180, %184 : vector<16x16xf32>
    %cst_61 = arith.constant dense<0.000000e+00> : vector<16x16xf32>
    %186 = tpu.matmul %185, %173, %cst_61 {dimension_numbers = #tpu.dot_dimension_numbers<[1], [0], [0], [1], [0, 0, 1, 1], [], []>} : vector<16x16xf32>, vector<16x16xf32>, vector<16x16xf32> -> vector<16x16xf32>
    %c440 = arith.constant 440 : index
    %c0_62 = arith.constant 0 : index
    %187 = vector.load %arg1[%c440, %c0_62] : memref<592x128xf32, #tpu.memory_space<vmem>>, vector<16x32xf32>
    %cst_63 = arith.constant dense<0.000000e+00> : vector<16x32xf32>
    %188 = tpu.matmul %186, %187, %cst_63 {dimension_numbers = #tpu.dot_dimension_numbers<[1], [0], [0], [1], [0, 0, 1, 1], [], []>} : vector<16x16xf32>, vector<16x32xf32>, vector<16x32xf32> -> vector<16x32xf32>
    %189 = vector.extract_strided_slice %170 {offsets = [0, 16], sizes = [16, 16], strides = [1, 1]} : vector<16x128xf32> to vector<16x16xf32>
    %190 = vector.extract_strided_slice %170 {offsets = [0, 48], sizes = [16, 16], strides = [1, 1]} : vector<16x128xf32> to vector<16x16xf32>
    %191 = vector.extract_strided_slice %170 {offsets = [0, 80], sizes = [16, 16], strides = [1, 1]} : vector<16x128xf32> to vector<16x16xf32>
    %cst_64 = arith.constant dense<0.000000e+00> : vector<16x16xf32>
    %192 = tpu.matmul %189, %190, %cst_64 {dimension_numbers = #tpu.dot_dimension_numbers<[1], [1], [0], [0], [0, 0, 1, 0], [], []>} : vector<16x16xf32>, vector<16x16xf32>, vector<16x16xf32> -> vector<16x16xf32>
    %193 = arith.addf %192, %46 : vector<16x16xf32>
    %cst_65 = arith.constant dense<0xFF800000> : vector<16xf32>
    %194 = vector.multi_reduction <maximumf>, %193, %cst_65 [1] : vector<16x16xf32> to vector<16xf32>
    %195 = vector.shape_cast %194 : vector<16xf32> to vector<16x1xf32>
    %196 = vector.broadcast %195 : vector<16x1xf32> to vector<16x16xf32>
    %197 = arith.subf %193, %196 : vector<16x16xf32>
    %198 = math.exp %197 : vector<16x16xf32>
    %cst_66 = arith.constant dense<0.000000e+00> : vector<16xf32>
    %199 = vector.multi_reduction <add>, %198, %cst_66 [1] : vector<16x16xf32> to vector<16xf32>
    %200 = vector.shape_cast %199 : vector<16xf32> to vector<16x1xf32>
    %201 = tpu.reciprocal %200 {approx = true} : vector<16x1xf32> -> vector<16x1xf32>
    %202 = vector.broadcast %201 : vector<16x1xf32> to vector<16x16xf32>
    %203 = arith.mulf %198, %202 : vector<16x16xf32>
    %cst_67 = arith.constant dense<0.000000e+00> : vector<16x16xf32>
    %204 = tpu.matmul %203, %191, %cst_67 {dimension_numbers = #tpu.dot_dimension_numbers<[1], [0], [0], [1], [0, 0, 1, 1], [], []>} : vector<16x16xf32>, vector<16x16xf32>, vector<16x16xf32> -> vector<16x16xf32>
    %c456 = arith.constant 456 : index
    %c0_68 = arith.constant 0 : index
    %205 = vector.load %arg1[%c456, %c0_68] : memref<592x128xf32, #tpu.memory_space<vmem>>, vector<16x32xf32>
    %cst_69 = arith.constant dense<0.000000e+00> : vector<16x32xf32>
    %206 = tpu.matmul %204, %205, %cst_69 {dimension_numbers = #tpu.dot_dimension_numbers<[1], [0], [0], [1], [0, 0, 1, 1], [], []>} : vector<16x16xf32>, vector<16x32xf32>, vector<16x32xf32> -> vector<16x32xf32>
    %207 = arith.addf %188, %206 : vector<16x32xf32>
    %c472 = arith.constant 472 : index
    %c0_70 = arith.constant 0 : index
    %208 = vector.load %arg1[%c472, %c0_70] : memref<592x128xf32, #tpu.memory_space<vmem>>, vector<1x32xf32>
    %209 = arith.addf %147, %207 : vector<16x32xf32>
    %210 = vector.broadcast %208 : vector<1x32xf32> to vector<16x32xf32>
    %211 = arith.addf %209, %210 : vector<16x32xf32>
    %cst_71 = arith.constant dense<0.000000e+00> : vector<16xf32>
    %212 = vector.multi_reduction <add>, %211, %cst_71 [1] : vector<16x32xf32> to vector<16xf32>
    %213 = vector.shape_cast %212 : vector<16xf32> to vector<16x1xf32>
    %cst_72 = arith.constant 3.200000e+01 : f32
    %214 = vector.broadcast %cst_72 : f32 to vector<16x1xf32>
    %215 = arith.divf %213, %214 : vector<16x1xf32>
    %216 = arith.mulf %211, %211 : vector<16x32xf32>
    %cst_73 = arith.constant dense<0.000000e+00> : vector<16xf32>
    %217 = vector.multi_reduction <add>, %216, %cst_73 [1] : vector<16x32xf32> to vector<16xf32>
    %218 = vector.shape_cast %217 : vector<16xf32> to vector<16x1xf32>
    %cst_74 = arith.constant 3.200000e+01 : f32
    %219 = vector.broadcast %cst_74 : f32 to vector<16x1xf32>
    %220 = arith.divf %218, %219 : vector<16x1xf32>
    %221 = vector.broadcast %215 : vector<16x1xf32> to vector<16x32xf32>
    %222 = arith.subf %211, %221 : vector<16x32xf32>
    %223 = arith.mulf %215, %215 : vector<16x1xf32>
    %224 = arith.subf %220, %223 : vector<16x1xf32>
    %cst_75 = arith.constant 9.99999974E-6 : f32
    %225 = vector.broadcast %cst_75 : f32 to vector<16x1xf32>
    %226 = arith.addf %224, %225 : vector<16x1xf32>
    %227 = math.rsqrt %226 : vector<16x1xf32>
    %228 = vector.broadcast %227 : vector<16x1xf32> to vector<16x32xf32>
    %229 = arith.mulf %222, %228 : vector<16x32xf32>
    %c480 = arith.constant 480 : index
    %c0_76 = arith.constant 0 : index
    %230 = vector.load %arg1[%c480, %c0_76] : memref<592x128xf32, #tpu.memory_space<vmem>>, vector<32x64xf32>
    %c512 = arith.constant 512 : index
    %c0_77 = arith.constant 0 : index
    %231 = vector.load %arg1[%c512, %c0_77] : memref<592x128xf32, #tpu.memory_space<vmem>>, vector<1x64xf32>
    %c520 = arith.constant 520 : index
    %c0_78 = arith.constant 0 : index
    %232 = vector.load %arg1[%c520, %c0_78] : memref<592x128xf32, #tpu.memory_space<vmem>>, vector<64x32xf32>
    %c584 = arith.constant 584 : index
    %c0_79 = arith.constant 0 : index
    %233 = vector.load %arg1[%c584, %c0_79] : memref<592x128xf32, #tpu.memory_space<vmem>>, vector<1x32xf32>
    %cst_80 = arith.constant dense<0.000000e+00> : vector<16x64xf32>
    %234 = tpu.matmul %229, %230, %cst_80 {dimension_numbers = #tpu.dot_dimension_numbers<[1], [0], [0], [1], [0, 0, 1, 1], [], []>} : vector<16x32xf32>, vector<32x64xf32>, vector<16x64xf32> -> vector<16x64xf32>
    %235 = vector.broadcast %231 : vector<1x64xf32> to vector<16x64xf32>
    %236 = arith.addf %234, %235 : vector<16x64xf32>
    %cst_81 = arith.constant 1.702000e+00 : f32
    %237 = vector.broadcast %cst_81 : f32 to vector<16x64xf32>
    %238 = arith.mulf %237, %236 : vector<16x64xf32>
    %239 = arith.negf %238 : vector<16x64xf32>
    %240 = math.exp %239 : vector<16x64xf32>
    %cst_82 = arith.constant 1.000000e+00 : f32
    %241 = vector.broadcast %cst_82 : f32 to vector<16x64xf32>
    %242 = arith.addf %241, %240 : vector<16x64xf32>
    %243 = arith.divf %241, %242 : vector<16x64xf32>
    %244 = arith.mulf %236, %243 : vector<16x64xf32>
    %cst_83 = arith.constant dense<0.000000e+00> : vector<16x32xf32>
    %245 = tpu.matmul %244, %232, %cst_83 {dimension_numbers = #tpu.dot_dimension_numbers<[1], [0], [0], [1], [0, 0, 1, 1], [], []>} : vector<16x64xf32>, vector<64x32xf32>, vector<16x32xf32> -> vector<16x32xf32>
    %246 = vector.broadcast %233 : vector<1x32xf32> to vector<16x32xf32>
    %247 = arith.addf %245, %246 : vector<16x32xf32>
    %248 = arith.addf %211, %247 : vector<16x32xf32>
    %249 = vector.extract_strided_slice %248 {offsets = [0, 0], sizes = [1, 32], strides = [1, 1]} : vector<16x32xf32> to vector<1x32xf32>
    %250 = vector.extract_strided_slice %248 {offsets = [8, 0], sizes = [1, 32], strides = [1, 1]} : vector<16x32xf32> to vector<1x32xf32>
    %251 = tpu.concatenate %249, %250 in 0 : vector<1x32xf32>, vector<1x32xf32> -> vector<2x32xf32>
    %cst_84 = arith.constant dense<0.000000e+00> : vector<2xf32>
    %252 = vector.multi_reduction <add>, %251, %cst_84 [1] : vector<2x32xf32> to vector<2xf32>
    %253 = vector.shape_cast %252 : vector<2xf32> to vector<2x1xf32>
    %cst_85 = arith.constant 3.200000e+01 : f32
    %254 = vector.broadcast %cst_85 : f32 to vector<2x1xf32>
    %255 = arith.divf %253, %254 : vector<2x1xf32>
    %256 = arith.mulf %251, %251 : vector<2x32xf32>
    %cst_86 = arith.constant dense<0.000000e+00> : vector<2xf32>
    %257 = vector.multi_reduction <add>, %256, %cst_86 [1] : vector<2x32xf32> to vector<2xf32>
    %258 = vector.shape_cast %257 : vector<2xf32> to vector<2x1xf32>
    %cst_87 = arith.constant 3.200000e+01 : f32
    %259 = vector.broadcast %cst_87 : f32 to vector<2x1xf32>
    %260 = arith.divf %258, %259 : vector<2x1xf32>
    %261 = vector.broadcast %255 : vector<2x1xf32> to vector<2x32xf32>
    %262 = arith.subf %251, %261 : vector<2x32xf32>
    %263 = arith.mulf %255, %255 : vector<2x1xf32>
    %264 = arith.subf %260, %263 : vector<2x1xf32>
    %cst_88 = arith.constant 9.99999974E-6 : f32
    %265 = vector.broadcast %cst_88 : f32 to vector<2x1xf32>
    %266 = arith.addf %264, %265 : vector<2x1xf32>
    %267 = math.rsqrt %266 : vector<2x1xf32>
    %268 = vector.broadcast %267 : vector<2x1xf32> to vector<2x32xf32>
    %269 = arith.mulf %262, %268 : vector<2x32xf32>
    %270 = vector.broadcast %4 : vector<1x32xf32> to vector<2x32xf32>
    %271 = arith.mulf %269, %270 : vector<2x32xf32>
    %cst_89 = arith.constant dense<0.000000e+00> : vector<2xf32>
    %272 = vector.multi_reduction <add>, %271, %cst_89 [1] : vector<2x32xf32> to vector<2xf32>
    %273 = vector.shape_cast %272 : vector<2xf32> to vector<2x1xf32>
    %274 = vector.broadcast %5 : vector<1x1xf32> to vector<2x1xf32>
    %275 = arith.addf %273, %274 : vector<2x1xf32>
    %276 = arith.negf %275 : vector<2x1xf32>
    %277 = math.exp %276 : vector<2x1xf32>
    %cst_90 = arith.constant 1.000000e+00 : f32
    %278 = vector.broadcast %cst_90 : f32 to vector<2x1xf32>
    %279 = arith.addf %278, %277 : vector<2x1xf32>
    %280 = arith.divf %278, %279 : vector<2x1xf32>
    %cst_91 = arith.constant 9.000000e+00 : f32
    %281 = vector.broadcast %cst_91 : f32 to vector<2x1xf32>
    %282 = arith.mulf %280, %281 : vector<2x1xf32>
    %cst_92 = arith.constant 1.000000e+00 : f32
    %283 = vector.broadcast %cst_92 : f32 to vector<2x1xf32>
    %284 = arith.addf %282, %283 : vector<2x1xf32>
    %c0_93 = arith.constant 0 : index
    %c0_94 = arith.constant 0 : index
    %285 = vector.load %arg2[%c0_93, %c0_94] : memref<2x1xf32, #tpu.memory_space<vmem>>, vector<2x1xf32>
    tpu.vector_store %arg2[%c0_93, %c0_94], %284 {strides = array<i32>} : memref<2x1xf32, #tpu.memory_space<vmem>>, vector<2x1xf32>,
    return
  }
}

</mosaic_0001>

<llo_original>
// kernel: aesthetic_predictor.1
$region0: #{aesthetic_predictor.1}
  #allocation0 [shape = 'u32[]', space=smem, size = 0x4, offset = 0x4, fixed_abs, tag = 'smem constant byte address 0x4 - core index']
  #allocation1 [shape = 'u32[144,128]{1,0:T(1,128)}', space=vmem, size = 0x12000, scoped, tag = 'internal scratch']
  %s0 = inlined_call_operand.vmem [shape: f32[16,192], index: 0, kind: input, shape index: {}]
  %s1 = inlined_call_operand.vmem [shape: f32[592,128], index: 1, kind: input, shape index: {}]
  %s2 = inlined_call_operand.vmem [shape: f32[2,1], index: 2, kind: output, shape index: {}]
  %s3 = sld [smem:[#allocation0]]
  $region18: #{aesthetic_predictor.1} parent=0
    _
  %s5 = ssub.s32 1, %s3
  %s6 = scalar_select 0, %s5, %s3
  // Predicated region
  $region2: #{aesthetic_predictor.1} parent=0 // pred_check
    _
  $region3: #{aesthetic_predictor.1} parent=0 // pred_check_branch
    %8 = sbr.rel (0) target = $region5
  $region4: #{aesthetic_predictor.1} parent=0 // pred_region
    _
  $region5: #{aesthetic_predictor.1} parent=0 // pred_fallthru
    _
  // Predicated region
  $region6: #{aesthetic_predictor.1} parent=0 // pred_check
    _
  $region7: #{aesthetic_predictor.1} parent=0 // pred_check_branch
    %10 = sbr.rel (0) target = $region9
  $region8: #{aesthetic_predictor.1} parent=0 // pred_region
    _
  $region9: #{aesthetic_predictor.1} parent=0 // pred_fallthru
    _
  %v11 = vld [vmem:[%s1] sm:$0xff]
  %v12 = vld [vmem:[%s1 + $0x8] sm:$0xff]
  %v13 = vld [vmem:[%s1 + $0x10] sm:$0xff]
  %v14 = vld [vmem:[%s1 + $0x18] sm:$0xff]
  %v15 = vld [vmem:[%s1 + $0x20] sm:$0xff]
  %v16 = vld [vmem:[%s1 + $0x28] sm:$0xff]
  %v17 = vld [vmem:[%s1 + $0x30] sm:$0xff]
  %v18 = vld [vmem:[%s1 + $0x38] sm:$0xff]
  %v19 = vld [vmem:[%s1 + $0x40] sm:$0xff]
  %v20 = vld [vmem:[%s1 + $0x48] sm:$0xff]
  %v21 = vld [vmem:[%s1 + $0x50] sm:$0xff]
  %v22 = vld [vmem:[%s1 + $0x58] sm:$0xff]
  %v23 = vld [vmem:[%s1 + $0x60] sm:$0xff]
  %v24 = vld [vmem:[%s1 + $0x68] sm:$0xff]
  %v25 = vld [vmem:[%s1 + $0x70] sm:$0xff]
  %v26 = vld [vmem:[%s1 + $0x78] sm:$0xff]
  %v27 = vld [vmem:[%s1 + $0x80] sm:$0xff]
  %v28 = vld [vmem:[%s1 + $0x88] sm:$0xff]
  %v29 = vld [vmem:[%s1 + $0x90] sm:$0xff]
  %v30 = vld [vmem:[%s1 + $0x98] sm:$0xff]
  %v31 = vld [vmem:[%s1 + $0xa0] sm:$0xff]
  %v32 = vld [vmem:[%s1 + $0xa8] sm:$0xff]
  %v33 = vld [vmem:[%s1 + $0xb0] sm:$0xff]
  %v34 = vld [vmem:[%s1 + $0xb8] sm:$0xff]
  %v35 = vld [vmem:[%s1 + $0xc0] sm:$0xff]
  %v36 = vld [vmem:[%s1 + $0xc8] sm:$0x1]
  %v37 = vld [vmem:[%s1 + $0xc9] sm:$0x1]
  %v38 = vld [vmem:[%s1 + $0xca] sm:$0x1]
  %v39 = vld [vmem:[%s1 + $0xcb] sm:$0x1]
  %v40 = vld [vmem:[%s0] sm:$0xff]
  %v41 = vld [vmem:[%s0 + $0x8] sm:$0xff]
  %v42 = vld [vmem:[%s0 + $0x10] sm:$0xff]
  %v43 = vld [vmem:[%s0 + $0x18] sm:$0xff]
  %vm44 = vcmask 523264
  %v46 = vsel %vm44, %v41, 0
  %v49 = vsel %vm44, %v43, 0
  %51 = vmatprep.subr.mxu0 0.0
  %52 = vmatpush1.msra.mxu0 %v26
  %53 = vmatprep.subr.mxu0 0.0
  %54 = vmatpush1.msra.mxu0 %v25
  %55 = vmatprep.subr.mxu0 0.0
  %56 = vmatpush1.msra.mxu0 %v24
  %57 = vmatprep.subr.mxu0 0.0
  %58 = vmatpush1.msra.mxu0 %v23
  %59 = vmatprep.subr.mxu0 0.0
  %60 = vmatpush1.msra.mxu0 %v22
  %61 = vmatprep.subr.mxu0 0.0
  %62 = vmatpush1.msra.mxu0 %v21
  %63 = vmatprep.subr.mxu0 0.0
  %64 = vmatpush1.msra.mxu0 %v20
  %65 = vmatprep.subr.mxu0 0.0
  %66 = vmatpush1.msra.mxu0 %v19
  %67 = vmatprep.subr.mxu0 0.0
  %68 = vmatpush1.msra.mxu0 %v18
  %69 = vmatprep.subr.mxu0 0.0
  %70 = vmatpush1.msra.mxu0 %v17
  %71 = vmatprep.subr.mxu0 0.0
  %72 = vmatpush1.msra.mxu0 %v16
  %73 = vmatprep.subr.mxu0 0.0
  %74 = vmatpush1.msra.mxu0 %v15
  %75 = vmatprep.subr.mxu0 0.0
  %76 = vmatpush1.msra.mxu0 %v14
  %77 = vmatprep.subr.mxu0 0.0
  %78 = vmatpush1.msra.mxu0 %v13
  %79 = vmatprep.subr.mxu0 0.0
  %80 = vmatpush1.msra.mxu0 %v12
  %81 = vmatprep.subr.mxu0 0.0
  %82 = vmatpush1.msra.mxu0 %v11
  %83 = vmatprep.subr.mxu0 0.0
  %84 = vmatpush2.msra.mxu0 0.0
  %85 = vmatprep.subr.mxu0 0.0
  %86 = vmatpush2.msra.mxu0 0.0
  %87 = vmatprep.subr.mxu0 0.0
  %88 = vmatpush2.msra.mxu0 0.0
  %89 = vmatprep.subr.mxu0 0.0
  %90 = vmatpush2.msra.mxu0 0.0
  %91 = vmatprep.subr.mxu0 0.0
  %92 = vmatpush2.msra.mxu0 0.0
  %93 = vmatprep.subr.mxu0 0.0
  %94 = vmatpush2.msra.mxu0 0.0
  %95 = vmatprep.subr.mxu0 0.0
  %96 = vmatpush2.msra.mxu0 0.0
  %97 = vmatprep.subr.mxu0 0.0
  %98 = vmatpush2.msra.mxu0 0.0
  %99 = vmatprep.subr.mxu0 0.0
  %100 = vmatpush2.msra.mxu0 %v34
  %101 = vmatprep.subr.mxu0 0.0
  %102 = vmatpush2.msra.mxu0 %v33
  %103 = vmatprep.subr.mxu0 0.0
  %104 = vmatpush2.msra.mxu0 %v32
  %105 = vmatprep.subr.mxu0 0.0
  %106 = vmatpush2.msra.mxu0 %v31
  %107 = vmatprep.subr.mxu0 0.0
  %108 = vmatpush2.msra.mxu0 %v30
  %109 = vmatprep.subr.mxu0 0.0
  %110 = vmatpush2.msra.mxu0 %v29
  %111 = vmatprep.subr.mxu0 0.0
  %112 = vmatpush2.msra.mxu0 %v28
  %113 = vmatprep.subr.mxu0 0.0
  %114 = vmatpush2.msra.mxu0 %v27
  %115 = vmatprep.mubr.f32.mxu0 %v46
  %116 = vmatmul.mubr.f32.gmra.mxu0 %v40
  %v117 = vpop.f32.mrf.mxu0
  %v118 = vadd.f32 %v35, %v117
  %v119 = vpop.f32.mrf.mxu0
  %120 = vmatprep.mubr.f32.mxu0 %v49
  %121 = vmatmul.mubr.f32.gmra.mxu0 %v42
  %v122 = vpop.f32.mrf.mxu0
  %v123 = vadd.f32 %v35, %v122
  %v124 = vpop.f32.mrf.mxu0
  %125 = vdwg.mxu0
  %vm126 = vcmask 261120
  %v127 = vsel %vm126, %v118, 0.0
  %128 = vadd.xlane.f32.xlu0 %v127
  %v129 = vpop.xlane.xlu0 %128
  %v130 = vsel %vm126, %v123, 0.0
  %131 = vadd.xlane.f32.xlu0 %v130
  %v132 = vpop.xlane.xlu0 %131
  %v133 = vrcp.pop 32.0
  %v134 = vmul.f32 %v129, %v133
  %v135 = vmul.f32 %v132, %v133
  %v136 = vmul.f32 %v118, %v118
  %v137 = vmul.f32 %v123, %v123
  %v138 = vsel %vm126, %v136, 0.0
  %139 = vadd.xlane.f32.xlu0 %v138
  %v140 = vpop.xlane.xlu0 %139
  %v141 = vsel %vm126, %v137, 0.0
  %142 = vadd.xlane.f32.xlu0 %v141
  %v143 = vpop.xlane.xlu0 %142
  %v144 = vmul.f32 %v140, %v133
  %v145 = vmul.f32 %v143, %v133
  %v146 = vsub.f32 %v118, %v134
  %v147 = vsub.f32 %v123, %v135
  %v148 = vmul.f32 %v134, %v134
  %v149 = vmul.f32 %v135, %v135
  %v150 = vsub.f32 %v144, %v148
  %v151 = vsub.f32 %v145, %v149
  %v152 = vadd.f32 %v150, 1e-05
  %v153 = vadd.f32 %v151, 1e-05
  %v154 = vrsqrt.pop %v152
  %v155 = vrsqrt.pop %v153
  %v156 = vmul.f32 %v146, %v154
  %v157 = vmul.f32 %v147, %v155
  %v158 = vlaneseq
  %v159 = vshrl.u32 %v158, 7
  %v160 = vsub.s32 0, %v159
  %v161 = vrot.slane %v36, %v160
  %v162 = vmul.f32 %v156, %v161
  %v163 = vmul.f32 %v157, %v161
  %v164 = vlaneseq
  %v165 = vshrl.u32 %v164, 7
  %v166 = vsub.s32 0, %v165
  %v167 = vrot.slane %v37, %v166
  %v168 = vadd.f32 %v162, %v167
  %v169 = vadd.f32 %v163, %v167
  %v170 = vlaneseq
  %v171 = vshrl.u32 %v170, 7
  %v172 = vadd.s32 %v171, 8
  %v173 = vlaneseq
  %v174 = vand.u32 %v173, 127
  %v175 = vshra.s32 %v171, 3
  %v176 = vshra.s32 %v172, 3
  %v177 = vshra.s32 %v174, 3
  %vm178 = vcmp.eq.s32.totalorder %v175, %v177
  %vm179 = vcmp.eq.s32.totalorder %v176, %v177
  %v180 = vand.u32 %v174, 7
  %vm181 = vcmp.lt.s32.totalorder %v180, 5
  %vm182 = vmand %vm178, %vm181
  %vm183 = vmand %vm179, %vm181
  %v184 = vsel %vm182, 0.0, -1e+30
  %v185 = vsel %vm183, 0.0, -1e+30
  %v186 = vsel %vm126, %v168, 0.0
  %187 = vadd.xlane.f32.xlu0 %v186
  %v188 = vpop.xlane.xlu0 %187
  %v189 = vsel %vm126, %v169, 0.0
  %190 = vadd.xlane.f32.xlu0 %v189
  %v191 = vpop.xlane.xlu0 %190
  %v192 = vmul.f32 %v188, %v133
  %v193 = vmul.f32 %v191, %v133
  %v194 = vmul.f32 %v168, %v168
  %v195 = vmul.f32 %v169, %v169
  %v196 = vsel %vm126, %v194, 0.0
  %197 = vadd.xlane.f32.xlu0 %v196
  %v198 = vpop.xlane.xlu0 %197
  %v199 = vsel %vm126, %v195, 0.0
  %200 = vadd.xlane.f32.xlu0 %v199
  %v201 = vpop.xlane.xlu0 %200
  %v202 = vmul.f32 %v198, %v133
  %v203 = vmul.f32 %v201, %v133
  %v204 = vsub.f32 %v168, %v192
  %v205 = vsub.f32 %v169, %v193
  %v206 = vmul.f32 %v192, %v192
  %v207 = vmul.f32 %v193, %v193
  %v208 = vsub.f32 %v202, %v206
  %v209 = vsub.f32 %v203, %v207
  %v210 = vadd.f32 %v208, 1e-05
  %v211 = vadd.f32 %v209, 1e-05
  %v212 = vrsqrt.pop %v210
  %v213 = vrsqrt.pop %v211
  %v214 = vmul.f32 %v204, %v212
  %v215 = vmul.f32 %v205, %v213
  %v216 = vld [vmem:[%s1 + $0xd0] sm:$0xff]
  %v217 = vld [vmem:[%s1 + $0xd8] sm:$0xff]
  %v218 = vld [vmem:[%s1 + $0xe0] sm:$0xff]
  %v219 = vld [vmem:[%s1 + $0xe8] sm:$0xff]
  %v220 = vld [vmem:[%s1 + $0xf0] sm:$0x1]
  %v221 = vlaneseq
  %v222 = vshrl.u32 %v221, 7
  %v223 = vsub.s32 0, %v222
  %v224 = vrot.slane %v220, %v223
  %v226 = vsel %vm126, %v214, 0
  %v229 = vsel %vm126, %v215, 0
  %231 = vmatprep.subr.mxu0 0.0
  %232 = vmatpush1.msra.mxu0 0.0
  %233 = vmatprep.subr.mxu0 0.0
  %234 = vmatpush1.msra.mxu0 0.0
  %235 = vmatprep.subr.mxu0 0.0
  %236 = vmatpush1.msra.mxu0 0.0
  %237 = vmatprep.subr.mxu0 0.0
  %238 = vmatpush1.msra.mxu0 0.0
  %239 = vmatprep.subr.mxu0 0.0
  %240 = vmatpush1.msra.mxu0 0.0
  %241 = vmatprep.subr.mxu0 0.0
  %242 = vmatpush1.msra.mxu0 0.0
  %243 = vmatprep.subr.mxu0 0.0
  %244 = vmatpush1.msra.mxu0 0.0
  %245 = vmatprep.subr.mxu0 0.0
  %246 = vmatpush1.msra.mxu0 0.0
  %247 = vmatprep.subr.mxu0 0.0
  %248 = vmatpush1.msra.mxu0 0.0
  %249 = vmatprep.subr.mxu0 0.0
  %250 = vmatpush1.msra.mxu0 0.0
  %251 = vmatprep.subr.mxu0 0.0
  %252 = vmatpush1.msra.mxu0 0.0
  %253 = vmatprep.subr.mxu0 0.0
  %254 = vmatpush1.msra.mxu0 0.0
  %255 = vmatprep.subr.mxu0 0.0
  %256 = vmatpush1.msra.mxu0 %v219
  %257 = vmatprep.subr.mxu0 0.0
  %258 = vmatpush1.msra.mxu0 %v218
  %259 = vmatprep.subr.mxu0 0.0
  %260 = vmatpush1.msra.mxu0 %v217
  %261 = vmatprep.subr.mxu0 0.0
  %262 = vmatpush1.msra.mxu0 %v216
  %263 = vmatprep.subr.mxu0 0.0
  %264 = vmatpush2.msra.mxu0 0.0
  %265 = vmatprep.subr.mxu0 0.0
  %266 = vmatpush2.msra.mxu0 0.0
  %267 = vmatprep.subr.mxu0 0.0
  %268 = vmatpush2.msra.mxu0 0.0
  %269 = vmatprep.subr.mxu0 0.0
  %270 = vmatpush2.msra.mxu0 0.0
  %271 = vmatprep.subr.mxu0 0.0
  %272 = vmatpush2.msra.mxu0 0.0
  %273 = vmatprep.subr.mxu0 0.0
  %274 = vmatpush2.msra.mxu0 0.0
  %275 = vmatprep.subr.mxu0 0.0
  %276 = vmatpush2.msra.mxu0 0.0
  %277 = vmatprep.subr.mxu0 0.0
  %278 = vmatpush2.msra.mxu0 0.0
  %279 = vmatprep.subr.mxu0 0.0
  %280 = vmatpush2.msra.mxu0 0.0
  %281 = vmatprep.subr.mxu0 0.0
  %282 = vmatpush2.msra.mxu0 0.0
  %283 = vmatprep.subr.mxu0 0.0
  %284 = vmatpush2.msra.mxu0 0.0
  %285 = vmatprep.subr.mxu0 0.0
  %286 = vmatpush2.msra.mxu0 0.0
  %287 = vmatprep.subr.mxu0 0.0
  %288 = vmatpush2.msra.mxu0 0.0
  %289 = vmatprep.subr.mxu0 0.0
  %290 = vmatpush2.msra.mxu0 0.0
  %291 = vmatprep.subr.mxu0 0.0
  %292 = vmatpush2.msra.mxu0 0.0
  %293 = vmatprep.subr.mxu0 0.0
  %294 = vmatpush2.msra.mxu0 0.0
  %295 = vmatprep.mubr.f32.mxu0 0.0
  %296 = vmatmul.mubr.f32.gmra.mxu0 %v226
  %v297 = vpop.f32.mrf.mxu0
  %v298 = vadd.f32 %v224, %v297
  %v299 = vpop.f32.mrf.mxu0
  %300 = vmatprep.mubr.f32.mxu0 0.0
  %301 = vmatmul.mubr.f32.gmra.mxu0 %v229
  %v302 = vpop.f32.mrf.mxu0
  %v303 = vadd.f32 %v224, %v302
  %v304 = vpop.f32.mrf.mxu0
  %305 = vdwg.mxu0
  %308 = vrot.lane.b32.xlu0 %v298, 96
  %v309 = vpop.permute.xlu0 %308
  %310 = vrot.lane.b32.xlu0 %v303, 96
  %v311 = vpop.permute.xlu0 %310
  %vm312 = vcmask 130048
  %v313 = vsel %vm312, %v298, 0
  %v315 = vsel %vm312, %v303, 0
  %v317 = vsel %vm312, %v309, 0
  %v319 = vsel %vm312, %v311, 0
  %321 = vmatprep.subr.mxu0 0.0
  %322 = vmatpush1.xpose.msra.mxu0 0.0
  %323 = vmatprep.subr.mxu0 0.0
  %324 = vmatpush1.xpose.msra.mxu0 0.0
  %325 = vmatprep.subr.mxu0 0.0
  %326 = vmatpush1.xpose.msra.mxu0 0.0
  %327 = vmatprep.subr.mxu0 0.0
  %328 = vmatpush1.xpose.msra.mxu0 0.0
  %329 = vmatprep.subr.mxu0 0.0
  %330 = vmatpush1.xpose.msra.mxu0 0.0
  %331 = vmatprep.subr.mxu0 0.0
  %332 = vmatpush1.xpose.msra.mxu0 0.0
  %333 = vmatprep.subr.mxu0 0.0
  %334 = vmatpush1.xpose.msra.mxu0 0.0
  %335 = vmatprep.subr.mxu0 0.0
  %336 = vmatpush1.xpose.msra.mxu0 0.0
  %337 = vmatprep.subr.mxu0 0.0
  %338 = vmatpush1.xpose.msra.mxu0 0.0
  %339 = vmatprep.subr.mxu0 0.0
  %340 = vmatpush1.xpose.msra.mxu0 0.0
  %341 = vmatprep.subr.mxu0 0.0
  %342 = vmatpush1.xpose.msra.mxu0 0.0
  %343 = vmatprep.subr.mxu0 0.0
  %344 = vmatpush1.xpose.msra.mxu0 0.0
  %345 = vmatprep.subr.mxu0 0.0
  %346 = vmatpush1.xpose.msra.mxu0 0.0
  %347 = vmatprep.subr.mxu0 0.0
  %348 = vmatpush1.xpose.msra.mxu0 0.0
  %349 = vmatprep.subr.mxu0 0.0
  %350 = vmatpush1.xpose.msra.mxu0 %v319
  %351 = vmatprep.subr.mxu0 0.0
  %352 = vmatpush1.xpose.msra.mxu0 %v317
  %353 = vmatprep.subr.mxu0 0.0
  %354 = vmatpush2.xpose.msra.mxu0 0.0
  %355 = vmatprep.subr.mxu0 0.0
  %356 = vmatpush2.xpose.msra.mxu0 0.0
  %357 = vmatprep.subr.mxu0 0.0
  %358 = vmatpush2.xpose.msra.mxu0 0.0
  %359 = vmatprep.subr.mxu0 0.0
  %360 = vmatpush2.xpose.msra.mxu0 0.0
  %361 = vmatprep.subr.mxu0 0.0
  %362 = vmatpush2.xpose.msra.mxu0 0.0
  %363 = vmatprep.subr.mxu0 0.0
  %364 = vmatpush2.xpose.msra.mxu0 0.0
  %365 = vmatprep.subr.mxu0 0.0
  %366 = vmatpush2.xpose.msra.mxu0 0.0
  %367 = vmatprep.subr.mxu0 0.0
  %368 = vmatpush2.xpose.msra.mxu0 0.0
  %369 = vmatprep.subr.mxu0 0.0
  %370 = vmatpush2.xpose.msra.mxu0 0.0
  %371 = vmatprep.subr.mxu0 0.0
  %372 = vmatpush2.xpose.msra.mxu0 0.0
  %373 = vmatprep.subr.mxu0 0.0
  %374 = vmatpush2.xpose.msra.mxu0 0.0
  %375 = vmatprep.subr.mxu0 0.0
  %376 = vmatpush2.xpose.msra.mxu0 0.0
  %377 = vmatprep.subr.mxu0 0.0
  %378 = vmatpush2.xpose.msra.mxu0 0.0
  %379 = vmatprep.subr.mxu0 0.0
  %380 = vmatpush2.xpose.msra.mxu0 0.0
  %381 = vmatprep.subr.mxu0 0.0
  %382 = vmatpush2.xpose.msra.mxu0 0.0
  %383 = vmatprep.subr.mxu0 0.0
  %384 = vmatpush2.xpose.msra.mxu0 0.0
  %385 = vmatprep.mubr.f32.mxu0 0.0
  %386 = vmatmul.mubr.f32.gmra.mxu0 %v313
  %v387 = vpop.f32.mrf.mxu0
  %v388 = vadd.f32 %v184, %v387
  %v389 = vpop.f32.mrf.mxu0
  %390 = vmatprep.mubr.f32.mxu0 0.0
  %391 = vmatmul.mubr.f32.gmra.mxu0 %v315
  %v392 = vpop.f32.mrf.mxu0
  %v393 = vadd.f32 %v185, %v392
  %v394 = vpop.f32.mrf.mxu0
  %395 = vdwg.mxu0
  %v396 = vsel %vm312, %v388, -inf
  %397 = vmax.xlane.f32.xlu0 %v396
  %v398 = vpop.xlane.xlu0 %397
  %v399 = vsel %vm312, %v393, -inf
  %400 = vmax.xlane.f32.xlu0 %v399
  %v401 = vpop.xlane.xlu0 %400
  %v402 = vsub.f32 %v388, %v398
  %v403 = vsub.f32 %v393, %v401
  %v404 = vmul.f32 %v402, 1.442695
  %v405 = vpow.pop %v404
  %v406 = vmul.f32 %v403, 1.442695
  %v407 = vpow.pop %v406
  %v408 = vsel %vm312, %v405, 0.0
  %409 = vadd.xlane.f32.xlu0 %v408
  %v410 = vpop.xlane.xlu0 %409
  %v411 = vsel %vm312, %v407, 0.0
  %412 = vadd.xlane.f32.xlu0 %v411
  %v413 = vpop.xlane.xlu0 %412
  %v414 = vrcp.pop %v410
  %v415 = vrcp.pop %v413
  %v416 = vmul.f32 %v405, %v414
  %v417 = vmul.f32 %v407, %v415
  %418 = vrot.lane.b32.xlu0 %v298, 64
  %v419 = vpop.permute.xlu0 %418
  %420 = vrot.lane.b32.xlu0 %v303, 64
  %v421 = vpop.permute.xlu0 %420
  %v425 = vsel %vm312, %v416, 0
  %v428 = vsel %vm312, %v417, 0
  %430 = vmatprep.subr.mxu0 0.0
  %431 = vmatpush1.msra.mxu0 0.0
  %432 = vmatprep.subr.mxu0 0.0
  %433 = vmatpush1.msra.mxu0 0.0
  %434 = vmatprep.subr.mxu0 0.0
  %435 = vmatpush1.msra.mxu0 0.0
  %436 = vmatprep.subr.mxu0 0.0
  %437 = vmatpush1.msra.mxu0 0.0
  %438 = vmatprep.subr.mxu0 0.0
  %439 = vmatpush1.msra.mxu0 0.0
  %440 = vmatprep.subr.mxu0 0.0
  %441 = vmatpush1.msra.mxu0 0.0
  %442 = vmatprep.subr.mxu0 0.0
  %443 = vmatpush1.msra.mxu0 0.0
  %444 = vmatprep.subr.mxu0 0.0
  %445 = vmatpush1.msra.mxu0 0.0
  %446 = vmatprep.subr.mxu0 0.0
  %447 = vmatpush1.msra.mxu0 0.0
  %448 = vmatprep.subr.mxu0 0.0
  %449 = vmatpush1.msra.mxu0 0.0
  %450 = vmatprep.subr.mxu0 0.0
  %451 = vmatpush1.msra.mxu0 0.0
  %452 = vmatprep.subr.mxu0 0.0
  %453 = vmatpush1.msra.mxu0 0.0
  %454 = vmatprep.subr.mxu0 0.0
  %455 = vmatpush1.msra.mxu0 0.0
  %456 = vmatprep.subr.mxu0 0.0
  %457 = vmatpush1.msra.mxu0 0.0
  %458 = vmatprep.subr.mxu0 0.0
  %459 = vmatpush1.msra.mxu0 %v421
  %460 = vmatprep.subr.mxu0 0.0
  %461 = vmatpush1.msra.mxu0 %v419
  %462 = vmatprep.subr.mxu0 0.0
  %463 = vmatpush2.msra.mxu0 0.0
  %464 = vmatprep.subr.mxu0 0.0
  %465 = vmatpush2.msra.mxu0 0.0
  %466 = vmatprep.subr.mxu0 0.0
  %467 = vmatpush2.msra.mxu0 0.0
  %468 = vmatprep.subr.mxu0 0.0
  %469 = vmatpush2.msra.mxu0 0.0
  %470 = vmatprep.subr.mxu0 0.0
  %471 = vmatpush2.msra.mxu0 0.0
  %472 = vmatprep.subr.mxu0 0.0
  %473 = vmatpush2.msra.mxu0 0.0
  %474 = vmatprep.subr.mxu0 0.0
  %475 = vmatpush2.msra.mxu0 0.0
  %476 = vmatprep.subr.mxu0 0.0
  %477 = vmatpush2.msra.mxu0 0.0
  %478 = vmatprep.subr.mxu0 0.0
  %479 = vmatpush2.msra.mxu0 0.0
  %480 = vmatprep.subr.mxu0 0.0
  %481 = vmatpush2.msra.mxu0 0.0
  %482 = vmatprep.subr.mxu0 0.0
  %483 = vmatpush2.msra.mxu0 0.0
  %484 = vmatprep.subr.mxu0 0.0
  %485 = vmatpush2.msra.mxu0 0.0
  %486 = vmatprep.subr.mxu0 0.0
  %487 = vmatpush2.msra.mxu0 0.0
  %488 = vmatprep.subr.mxu0 0.0
  %489 = vmatpush2.msra.mxu0 0.0
  %490 = vmatprep.subr.mxu0 0.0
  %491 = vmatpush2.msra.mxu0 0.0
  %492 = vmatprep.subr.mxu0 0.0
  %493 = vmatpush2.msra.mxu0 0.0
  %494 = vmatprep.mubr.f32.mxu0 0.0
  %495 = vmatmul.mubr.f32.gmra.mxu0 %v425
  %v496 = vpop.f32.mrf.mxu0
  %v497 = vadd.f32 0.0, %v496
  %v498 = vpop.f32.mrf.mxu0
  %499 = vmatprep.mubr.f32.mxu0 0.0
  %500 = vmatmul.mubr.f32.gmra.mxu0 %v428
  %v501 = vpop.f32.mrf.mxu0
  %v502 = vadd.f32 0.0, %v501
  %v503 = vpop.f32.mrf.mxu0
  %504 = vdwg.mxu0
  %v505 = vld [vmem:[%s1 + $0xf8] sm:$0xff]
  %v506 = vld [vmem:[%s1 + $0x100] sm:$0xff]
  %507 = vrot.lane.b32.xlu0 %v298, 112
  %v508 = vpop.permute.xlu0 %507
  %509 = vrot.lane.b32.xlu0 %v303, 112
  %v510 = vpop.permute.xlu0 %509
  %511 = vrot.lane.b32.xlu0 %v298, 80
  %v512 = vpop.permute.xlu0 %511
  %513 = vrot.lane.b32.xlu0 %v303, 80
  %v514 = vpop.permute.xlu0 %513
  %v515 = vsel %vm312, %v508, 0
  %v517 = vsel %vm312, %v510, 0
  %v519 = vsel %vm312, %v512, 0
  %v521 = vsel %vm312, %v514, 0
  %523 = vmatprep.subr.mxu0 0.0
  %524 = vmatpush1.xpose.msra.mxu0 0.0
  %525 = vmatprep.subr.mxu0 0.0
  %526 = vmatpush1.xpose.msra.mxu0 0.0
  %527 = vmatprep.subr.mxu0 0.0
  %528 = vmatpush1.xpose.msra.mxu0 0.0
  %529 = vmatprep.subr.mxu0 0.0
  %530 = vmatpush1.xpose.msra.mxu0 0.0
  %531 = vmatprep.subr.mxu0 0.0
  %532 = vmatpush1.xpose.msra.mxu0 0.0
  %533 = vmatprep.subr.mxu0 0.0
  %534 = vmatpush1.xpose.msra.mxu0 0.0
  %535 = vmatprep.subr.mxu0 0.0
  %536 = vmatpush1.xpose.msra.mxu0 0.0
  %537 = vmatprep.subr.mxu0 0.0
  %538 = vmatpush1.xpose.msra.mxu0 0.0
  %539 = vmatprep.subr.mxu0 0.0
  %540 = vmatpush1.xpose.msra.mxu0 0.0
  %541 = vmatprep.subr.mxu0 0.0
  %542 = vmatpush1.xpose.msra.mxu0 0.0
  %543 = vmatprep.subr.mxu0 0.0
  %544 = vmatpush1.xpose.msra.mxu0 0.0
  %545 = vmatprep.subr.mxu0 0.0
  %546 = vmatpush1.xpose.msra.mxu0 0.0
  %547 = vmatprep.subr.mxu0 0.0
  %548 = vmatpush1.xpose.msra.mxu0 0.0
  %549 = vmatprep.subr.mxu0 0.0
  %550 = vmatpush1.xpose.msra.mxu0 0.0
  %551 = vmatprep.subr.mxu0 0.0
  %552 = vmatpush1.xpose.msra.mxu0 %v521
  %553 = vmatprep.subr.mxu0 0.0
  %554 = vmatpush1.xpose.msra.mxu0 %v519
  %555 = vmatprep.subr.mxu0 0.0
  %556 = vmatpush2.xpose.msra.mxu0 0.0
  %557 = vmatprep.subr.mxu0 0.0
  %558 = vmatpush2.xpose.msra.mxu0 0.0
  %559 = vmatprep.subr.mxu0 0.0
  %560 = vmatpush2.xpose.msra.mxu0 0.0
  %561 = vmatprep.subr.mxu0 0.0
  %562 = vmatpush2.xpose.msra.mxu0 0.0
  %563 = vmatprep.subr.mxu0 0.0
  %564 = vmatpush2.xpose.msra.mxu0 0.0
  %565 = vmatprep.subr.mxu0 0.0
  %566 = vmatpush2.xpose.msra.mxu0 0.0
  %567 = vmatprep.subr.mxu0 0.0
  %568 = vmatpush2.xpose.msra.mxu0 0.0
  %569 = vmatprep.subr.mxu0 0.0
  %570 = vmatpush2.xpose.msra.mxu0 0.0
  %571 = vmatprep.subr.mxu0 0.0
  %572 = vmatpush2.xpose.msra.mxu0 0.0
  %573 = vmatprep.subr.mxu0 0.0
  %574 = vmatpush2.xpose.msra.mxu0 0.0
  %575 = vmatprep.subr.mxu0 0.0
  %576 = vmatpush2.xpose.msra.mxu0 0.0
  %577 = vmatprep.subr.mxu0 0.0
  %578 = vmatpush2.xpose.msra.mxu0 0.0
  %579 = vmatprep.subr.mxu0 0.0
  %580 = vmatpush2.xpose.msra.mxu0 0.0
  %581 = vmatprep.subr.mxu0 0.0
  %582 = vmatpush2.xpose.msra.mxu0 0.0
  %583 = vmatprep.subr.mxu0 0.0
  %584 = vmatpush2.xpose.msra.mxu0 0.0
  %585 = vmatprep.subr.mxu0 0.0
  %586 = vmatpush2.xpose.msra.mxu0 0.0
  %587 = vmatprep.mubr.f32.mxu0 0.0
  %588 = vmatmul.mubr.f32.gmra.mxu0 %v515
  %v589 = vpop.f32.mrf.mxu0
  %v590 = vadd.f32 %v184, %v589
  %v591 = vpop.f32.mrf.mxu0
  %592 = vmatprep.mubr.f32.mxu0 0.0
  %593 = vmatmul.mubr.f32.gmra.mxu0 %v517
  %v594 = vpop.f32.mrf.mxu0
  %v595 = vadd.f32 %v185, %v594
  %v596 = vpop.f32.mrf.mxu0
  %597 = vdwg.mxu0
  %v598 = vsel %vm312, %v590, -inf
  %599 = vmax.xlane.f32.xlu0 %v598
  %v600 = vpop.xlane.xlu0 %599
  %v601 = vsel %vm312, %v595, -inf
  %602 = vmax.xlane.f32.xlu0 %v601
  %v603 = vpop.xlane.xlu0 %602
  %v604 = vsub.f32 %v590, %v600
  %v605 = vsub.f32 %v595, %v603
  %v606 = vmul.f32 %v604, 1.442695
  %v607 = vpow.pop %v606
  %v608 = vmul.f32 %v605, 1.442695
  %v609 = vpow.pop %v608
  %v610 = vsel %vm312, %v607, 0.0
  %611 = vadd.xlane.f32.xlu0 %v610
  %v612 = vpop.xlane.xlu0 %611
  %v613 = vsel %vm312, %v609, 0.0
  %614 = vadd.xlane.f32.xlu0 %v613
  %v615 = vpop.xlane.xlu0 %614
  %v616 = vrcp.pop %v612
  %v617 = vrcp.pop %v615
  %v618 = vmul.f32 %v607, %v616
  %v619 = vmul.f32 %v609, %v617
  %620 = vrot.lane.b32.xlu0 %v298, 48
  %v621 = vpop.permute.xlu0 %620
  %622 = vrot.lane.b32.xlu0 %v303, 48
  %v623 = vpop.permute.xlu0 %622
  %v627 = vsel %vm312, %v618, 0
  %v630 = vsel %vm312, %v619, 0
  %632 = vmatprep.subr.mxu0 0.0
  %633 = vmatpush1.msra.mxu0 0.0
  %634 = vmatprep.subr.mxu0 0.0
  %635 = vmatpush1.msra.mxu0 0.0
  %636 = vmatprep.subr.mxu0 0.0
  %637 = vmatpush1.msra.mxu0 0.0
  %638 = vmatprep.subr.mxu0 0.0
  %639 = vmatpush1.msra.mxu0 0.0
  %640 = vmatprep.subr.mxu0 0.0
  %641 = vmatpush1.msra.mxu0 0.0
  %642 = vmatprep.subr.mxu0 0.0
  %643 = vmatpush1.msra.mxu0 0.0
  %644 = vmatprep.subr.mxu0 0.0
  %645 = vmatpush1.msra.mxu0 0.0
  %646 = vmatprep.subr.mxu0 0.0
  %647 = vmatpush1.msra.mxu0 0.0
  %648 = vmatprep.subr.mxu0 0.0
  %649 = vmatpush1.msra.mxu0 0.0
  %650 = vmatprep.subr.mxu0 0.0
  %651 = vmatpush1.msra.mxu0 0.0
  %652 = vmatprep.subr.mxu0 0.0
  %653 = vmatpush1.msra.mxu0 0.0
  %654 = vmatprep.subr.mxu0 0.0
  %655 = vmatpush1.msra.mxu0 0.0
  %656 = vmatprep.subr.mxu0 0.0
  %657 = vmatpush1.msra.mxu0 0.0
  %658 = vmatprep.subr.mxu0 0.0
  %659 = vmatpush1.msra.mxu0 0.0
  %660 = vmatprep.subr.mxu0 0.0
  %661 = vmatpush1.msra.mxu0 %v623
  %662 = vmatprep.subr.mxu0 0.0
  %663 = vmatpush1.msra.mxu0 %v621
  %664 = vmatprep.subr.mxu0 0.0
  %665 = vmatpush2.msra.mxu0 0.0
  %666 = vmatprep.subr.mxu0 0.0
  %667 = vmatpush2.msra.mxu0 0.0
  %668 = vmatprep.subr.mxu0 0.0
  %669 = vmatpush2.msra.mxu0 0.0
  %670 = vmatprep.subr.mxu0 0.0
  %671 = vmatpush2.msra.mxu0 0.0
  %672 = vmatprep.subr.mxu0 0.0
  %673 = vmatpush2.msra.mxu0 0.0
  %674 = vmatprep.subr.mxu0 0.0
  %675 = vmatpush2.msra.mxu0 0.0
  %676 = vmatprep.subr.mxu0 0.0
  %677 = vmatpush2.msra.mxu0 0.0
  %678 = vmatprep.subr.mxu0 0.0
  %679 = vmatpush2.msra.mxu0 0.0
  %680 = vmatprep.subr.mxu0 0.0
  %681 = vmatpush2.msra.mxu0 0.0
  %682 = vmatprep.subr.mxu0 0.0
  %683 = vmatpush2.msra.mxu0 0.0
  %684 = vmatprep.subr.mxu0 0.0
  %685 = vmatpush2.msra.mxu0 0.0
  %686 = vmatprep.subr.mxu0 0.0
  %687 = vmatpush2.msra.mxu0 0.0
  %688 = vmatprep.subr.mxu0 0.0
  %689 = vmatpush2.msra.mxu0 0.0
  %690 = vmatprep.subr.mxu0 0.0
  %691 = vmatpush2.msra.mxu0 0.0
  %692 = vmatprep.subr.mxu0 0.0
  %693 = vmatpush2.msra.mxu0 0.0
  %694 = vmatprep.subr.mxu0 0.0
  %695 = vmatpush2.msra.mxu0 0.0
  %696 = vmatprep.mubr.f32.mxu0 0.0
  %697 = vmatmul.mubr.f32.gmra.mxu0 %v627
  %v698 = vpop.f32.mrf.mxu0
  %v699 = vadd.f32 0.0, %v698
  %v700 = vpop.f32.mrf.mxu0
  %701 = vmatprep.mubr.f32.mxu0 0.0
  %702 = vmatmul.mubr.f32.gmra.mxu0 %v630
  %v703 = vpop.f32.mrf.mxu0
  %v704 = vadd.f32 0.0, %v703
  %v705 = vpop.f32.mrf.mxu0
  %706 = vdwg.mxu0
  %v707 = vld [vmem:[%s1 + $0x108] sm:$0xff]
  %v708 = vld [vmem:[%s1 + $0x110] sm:$0xff]
  %v710 = vsel %vm312, %v699, 0
  %v713 = vsel %vm312, %v704, 0
  %715 = vmatprep.subr.mxu0 0.0
  %716 = vmatpush1.msra.mxu0 0.0
  %717 = vmatprep.subr.mxu0 0.0
  %718 = vmatpush1.msra.mxu0 0.0
  %719 = vmatprep.subr.mxu0 0.0
  %720 = vmatpush1.msra.mxu0 0.0
  %721 = vmatprep.subr.mxu0 0.0
  %722 = vmatpush1.msra.mxu0 0.0
  %723 = vmatprep.subr.mxu0 0.0
  %724 = vmatpush1.msra.mxu0 0.0
  %725 = vmatprep.subr.mxu0 0.0
  %726 = vmatpush1.msra.mxu0 0.0
  %727 = vmatprep.subr.mxu0 0.0
  %728 = vmatpush1.msra.mxu0 0.0
  %729 = vmatprep.subr.mxu0 0.0
  %730 = vmatpush1.msra.mxu0 0.0
  %731 = vmatprep.subr.mxu0 0.0
  %732 = vmatpush1.msra.mxu0 0.0
  %733 = vmatprep.subr.mxu0 0.0
  %734 = vmatpush1.msra.mxu0 0.0
  %735 = vmatprep.subr.mxu0 0.0
  %736 = vmatpush1.msra.mxu0 0.0
  %737 = vmatprep.subr.mxu0 0.0
  %738 = vmatpush1.msra.mxu0 0.0
  %739 = vmatprep.subr.mxu0 0.0
  %740 = vmatpush1.msra.mxu0 0.0
  %741 = vmatprep.subr.mxu0 0.0
  %742 = vmatpush1.msra.mxu0 0.0
  %743 = vmatprep.subr.mxu0 0.0
  %744 = vmatpush1.msra.mxu0 %v708
  %745 = vmatprep.subr.mxu0 0.0
  %746 = vmatpush1.msra.mxu0 %v707
  %747 = vmatprep.subr.mxu0 0.0
  %748 = vmatpush2.msra.mxu0 0.0
  %749 = vmatprep.subr.mxu0 0.0
  %750 = vmatpush2.msra.mxu0 0.0
  %751 = vmatprep.subr.mxu0 0.0
  %752 = vmatpush2.msra.mxu0 0.0
  %753 = vmatprep.subr.mxu0 0.0
  %754 = vmatpush2.msra.mxu0 0.0
  %755 = vmatprep.subr.mxu0 0.0
  %756 = vmatpush2.msra.mxu0 0.0
  %757 = vmatprep.subr.mxu0 0.0
  %758 = vmatpush2.msra.mxu0 0.0
  %759 = vmatprep.subr.mxu0 0.0
  %760 = vmatpush2.msra.mxu0 0.0
  %761 = vmatprep.subr.mxu0 0.0
  %762 = vmatpush2.msra.mxu0 0.0
  %763 = vmatprep.subr.mxu0 0.0
  %764 = vmatpush2.msra.mxu0 0.0
  %765 = vmatprep.subr.mxu0 0.0
  %766 = vmatpush2.msra.mxu0 0.0
  %767 = vmatprep.subr.mxu0 0.0
  %768 = vmatpush2.msra.mxu0 0.0
  %769 = vmatprep.subr.mxu0 0.0
  %770 = vmatpush2.msra.mxu0 0.0
  %771 = vmatprep.subr.mxu0 0.0
  %772 = vmatpush2.msra.mxu0 0.0
  %773 = vmatprep.subr.mxu0 0.0
  %774 = vmatpush2.msra.mxu0 0.0
  %775 = vmatprep.subr.mxu0 0.0
  %776 = vmatpush2.msra.mxu0 0.0
  %777 = vmatprep.subr.mxu0 0.0
  %778 = vmatpush2.msra.mxu0 0.0
  %779 = vmatprep.mubr.f32.mxu0 0.0
  %780 = vmatmul.mubr.f32.gmra.mxu0 %v710
  %v781 = vpop.f32.mrf.mxu0
  %v782 = vadd.f32 0.0, %v781
  %v783 = vpop.f32.mrf.mxu0
  %784 = vmatprep.mubr.f32.mxu0 0.0
  %785 = vmatmul.mubr.f32.gmra.mxu0 %v713
  %v786 = vpop.f32.mrf.mxu0
  %v787 = vadd.f32 0.0, %v786
  %v788 = vpop.f32.mrf.mxu0
  %789 = vdwg.mxu0
  %v791 = vsel %vm312, %v497, 0
  %v794 = vsel %vm312, %v502, 0
  %796 = vmatprep.subr.mxu0 0.0
  %797 = vmatpush1.msra.mxu0 0.0
  %798 = vmatprep.subr.mxu0 0.0
  %799 = vmatpush1.msra.mxu0 0.0
  %800 = vmatprep.subr.mxu0 0.0
  %801 = vmatpush1.msra.mxu0 0.0
  %802 = vmatprep.subr.mxu0 0.0
  %803 = vmatpush1.msra.mxu0 0.0
  %804 = vmatprep.subr.mxu0 0.0
  %805 = vmatpush1.msra.mxu0 0.0
  %806 = vmatprep.subr.mxu0 0.0
  %807 = vmatpush1.msra.mxu0 0.0
  %808 = vmatprep.subr.mxu0 0.0
  %809 = vmatpush1.msra.mxu0 0.0
  %810 = vmatprep.subr.mxu0 0.0
  %811 = vmatpush1.msra.mxu0 0.0
  %812 = vmatprep.subr.mxu0 0.0
  %813 = vmatpush1.msra.mxu0 0.0
  %814 = vmatprep.subr.mxu0 0.0
  %815 = vmatpush1.msra.mxu0 0.0
  %816 = vmatprep.subr.mxu0 0.0
  %817 = vmatpush1.msra.mxu0 0.0
  %818 = vmatprep.subr.mxu0 0.0
  %819 = vmatpush1.msra.mxu0 0.0
  %820 = vmatprep.subr.mxu0 0.0
  %821 = vmatpush1.msra.mxu0 0.0
  %822 = vmatprep.subr.mxu0 0.0
  %823 = vmatpush1.msra.mxu0 0.0
  %824 = vmatprep.subr.mxu0 0.0
  %825 = vmatpush1.msra.mxu0 %v506
  %826 = vmatprep.subr.mxu0 0.0
  %827 = vmatpush1.msra.mxu0 %v505
  %828 = vmatprep.subr.mxu0 0.0
  %829 = vmatpush2.msra.mxu0 0.0
  %830 = vmatprep.subr.mxu0 0.0
  %831 = vmatpush2.msra.mxu0 0.0
  %832 = vmatprep.subr.mxu0 0.0
  %833 = vmatpush2.msra.mxu0 0.0
  %834 = vmatprep.subr.mxu0 0.0
  %835 = vmatpush2.msra.mxu0 0.0
  %836 = vmatprep.subr.mxu0 0.0
  %837 = vmatpush2.msra.mxu0 0.0
  %838 = vmatprep.subr.mxu0 0.0
  %839 = vmatpush2.msra.mxu0 0.0
  %840 = vmatprep.subr.mxu0 0.0
  %841 = vmatpush2.msra.mxu0 0.0
  %842 = vmatprep.subr.mxu0 0.0
  %843 = vmatpush2.msra.mxu0 0.0
  %844 = vmatprep.subr.mxu0 0.0
  %845 = vmatpush2.msra.mxu0 0.0
  %846 = vmatprep.subr.mxu0 0.0
  %847 = vmatpush2.msra.mxu0 0.0
  %848 = vmatprep.subr.mxu0 0.0
  %849 = vmatpush2.msra.mxu0 0.0
  %850 = vmatprep.subr.mxu0 0.0
  %851 = vmatpush2.msra.mxu0 0.0
  %852 = vmatprep.subr.mxu0 0.0
  %853 = vmatpush2.msra.mxu0 0.0
  %854 = vmatprep.subr.mxu0 0.0
  %855 = vmatpush2.msra.mxu0 0.0
  %856 = vmatprep.subr.mxu0 0.0
  %857 = vmatpush2.msra.mxu0 0.0
  %858 = vmatprep.subr.mxu0 0.0
  %859 = vmatpush2.msra.mxu0 0.0
  %860 = vmatprep.mubr.f32.mxu0 0.0
  %861 = vmatmul.mubr.f32.gmra.mxu0 %v791
  %v862 = vpop.f32.mrf.mxu0
  %v863 = vadd.f32 %v782, %v862
  %v864 = vpop.f32.mrf.mxu0
  %865 = vmatprep.mubr.f32.mxu0 0.0
  %866 = vmatmul.mubr.f32.gmra.mxu0 %v794
  %v867 = vpop.f32.mrf.mxu0
  %v868 = vadd.f32 %v787, %v867
  %v869 = vpop.f32.mrf.mxu0
  %870 = vdwg.mxu0
  %v871 = vld [vmem:[%s1 + $0x118] sm:$0x1]
  %v872 = vadd.f32 %v168, %v863
  %v873 = vadd.f32 %v169, %v868
  %v874 = vlaneseq
  %v875 = vshrl.u32 %v874, 7
  %v876 = vsub.s32 0, %v875
  %v877 = vrot.slane %v871, %v876
  %v878 = vadd.f32 %v872, %v877
  %v879 = vadd.f32 %v873, %v877
  %v880 = vsel %vm126, %v878, 0.0
  %881 = vadd.xlane.f32.xlu0 %v880
  %v882 = vpop.xlane.xlu0 %881
  %v883 = vsel %vm126, %v879, 0.0
  %884 = vadd.xlane.f32.xlu0 %v883
  %v885 = vpop.xlane.xlu0 %884
  %v886 = vmul.f32 %v882, %v133
  %v887 = vmul.f32 %v885, %v133
  %v888 = vmul.f32 %v878, %v878
  %v889 = vmul.f32 %v879, %v879
  %v890 = vsel %vm126, %v888, 0.0
  %891 = vadd.xlane.f32.xlu0 %v890
  %v892 = vpop.xlane.xlu0 %891
  %v893 = vsel %vm126, %v889, 0.0
  %894 = vadd.xlane.f32.xlu0 %v893
  %v895 = vpop.xlane.xlu0 %894
  %v896 = vmul.f32 %v892, %v133
  %v897 = vmul.f32 %v895, %v133
  %v898 = vsub.f32 %v878, %v886
  %v899 = vsub.f32 %v879, %v887
  %v900 = vmul.f32 %v886, %v886
  %v901 = vmul.f32 %v887, %v887
  %v902 = vsub.f32 %v896, %v900
  %v903 = vsub.f32 %v897, %v901
  %v904 = vadd.f32 %v902, 1e-05
  %v905 = vadd.f32 %v903, 1e-05
  %v906 = vrsqrt.pop %v904
  %v907 = vrsqrt.pop %v905
  %v908 = vmul.f32 %v898, %v906
  %v909 = vmul.f32 %v899, %v907
  %v910 = vld [vmem:[%s1 + $0x120] sm:$0xff]
  %v911 = vld [vmem:[%s1 + $0x128] sm:$0xff]
  %v912 = vld [vmem:[%s1 + $0x130] sm:$0xff]
  %v913 = vld [vmem:[%s1 + $0x138] sm:$0xff]
  %v914 = vld [vmem:[%s1 + $0x140] sm:$0x1]
  %v915 = vld [vmem:[%s1 + $0x148] sm:$0xff]
  %v916 = vld [vmem:[%s1 + $0x150] sm:$0xff]
  %v917 = vld [vmem:[%s1 + $0x158] sm:$0xff]
  %v918 = vld [vmem:[%s1 + $0x160] sm:$0xff]
  %v919 = vld [vmem:[%s1 + $0x168] sm:$0xff]
  %v920 = vld [vmem:[%s1 + $0x170] sm:$0xff]
  %v921 = vld [vmem:[%s1 + $0x178] sm:$0xff]
  %v922 = vld [vmem:[%s1 + $0x180] sm:$0xff]
  %v923 = vld [vmem:[%s1 + $0x188] sm:$0x1]
  %v924 = vlaneseq
  %v925 = vshrl.u32 %v924, 7
  %v926 = vsub.s32 0, %v925
  %v927 = vrot.slane %v914, %v926
  %v929 = vsel %vm126, %v908, 0
  %v932 = vsel %vm126, %v909, 0
  %934 = vmatprep.subr.mxu0 0.0
  %935 = vmatpush1.msra.mxu0 0.0
  %936 = vmatprep.subr.mxu0 0.0
  %937 = vmatpush1.msra.mxu0 0.0
  %938 = vmatprep.subr.mxu0 0.0
  %939 = vmatpush1.msra.mxu0 0.0
  %940 = vmatprep.subr.mxu0 0.0
  %941 = vmatpush1.msra.mxu0 0.0
  %942 = vmatprep.subr.mxu0 0.0
  %943 = vmatpush1.msra.mxu0 0.0
  %944 = vmatprep.subr.mxu0 0.0
  %945 = vmatpush1.msra.mxu0 0.0
  %946 = vmatprep.subr.mxu0 0.0
  %947 = vmatpush1.msra.mxu0 0.0
  %948 = vmatprep.subr.mxu0 0.0
  %949 = vmatpush1.msra.mxu0 0.0
  %950 = vmatprep.subr.mxu0 0.0
  %951 = vmatpush1.msra.mxu0 0.0
  %952 = vmatprep.subr.mxu0 0.0
  %953 = vmatpush1.msra.mxu0 0.0
  %954 = vmatprep.subr.mxu0 0.0
  %955 = vmatpush1.msra.mxu0 0.0
  %956 = vmatprep.subr.mxu0 0.0
  %957 = vmatpush1.msra.mxu0 0.0
  %958 = vmatprep.subr.mxu0 0.0
  %959 = vmatpush1.msra.mxu0 %v913
  %960 = vmatprep.subr.mxu0 0.0
  %961 = vmatpush1.msra.mxu0 %v912
  %962 = vmatprep.subr.mxu0 0.0
  %963 = vmatpush1.msra.mxu0 %v911
  %964 = vmatprep.subr.mxu0 0.0
  %965 = vmatpush1.msra.mxu0 %v910
  %966 = vmatprep.subr.mxu0 0.0
  %967 = vmatpush2.msra.mxu0 0.0
  %968 = vmatprep.subr.mxu0 0.0
  %969 = vmatpush2.msra.mxu0 0.0
  %970 = vmatprep.subr.mxu0 0.0
  %971 = vmatpush2.msra.mxu0 0.0
  %972 = vmatprep.subr.mxu0 0.0
  %973 = vmatpush2.msra.mxu0 0.0
  %974 = vmatprep.subr.mxu0 0.0
  %975 = vmatpush2.msra.mxu0 0.0
  %976 = vmatprep.subr.mxu0 0.0
  %977 = vmatpush2.msra.mxu0 0.0
  %978 = vmatprep.subr.mxu0 0.0
  %979 = vmatpush2.msra.mxu0 0.0
  %980 = vmatprep.subr.mxu0 0.0
  %981 = vmatpush2.msra.mxu0 0.0
  %982 = vmatprep.subr.mxu0 0.0
  %983 = vmatpush2.msra.mxu0 0.0
  %984 = vmatprep.subr.mxu0 0.0
  %985 = vmatpush2.msra.mxu0 0.0
  %986 = vmatprep.subr.mxu0 0.0
  %987 = vmatpush2.msra.mxu0 0.0
  %988 = vmatprep.subr.mxu0 0.0
  %989 = vmatpush2.msra.mxu0 0.0
  %990 = vmatprep.subr.mxu0 0.0
  %991 = vmatpush2.msra.mxu0 0.0
  %992 = vmatprep.subr.mxu0 0.0
  %993 = vmatpush2.msra.mxu0 0.0
  %994 = vmatprep.subr.mxu0 0.0
  %995 = vmatpush2.msra.mxu0 0.0
  %996 = vmatprep.subr.mxu0 0.0
  %997 = vmatpush2.msra.mxu0 0.0
  %998 = vmatprep.mubr.f32.mxu0 0.0
  %999 = vmatmul.mubr.f32.gmra.mxu0 %v929
  %v1000 = vpop.f32.mrf.mxu0
  %v1001 = vadd.f32 %v927, %v1000
  %v1002 = vpop.f32.mrf.mxu0
  %1003 = vmatprep.mubr.f32.mxu0 0.0
  %1004 = vmatmul.mubr.f32.gmra.mxu0 %v932
  %v1005 = vpop.f32.mrf.mxu0
  %v1006 = vadd.f32 %v927, %v1005
  %v1007 = vpop.f32.mrf.mxu0
  %1008 = vdwg.mxu0
  %v1009 = vmul.f32 %v1001, 1.702
  %v1010 = vmul.f32 %v1006, 1.702
  %v1011 = vxor.u32 %v1009, 2147483648
  %v1012 = vxor.u32 %v1010, 2147483648
  %v1013 = vmul.f32 %v1011, 1.442695
  %v1014 = vpow.pop %v1013
  %v1015 = vmul.f32 %v1012, 1.442695
  %v1016 = vpow.pop %v1015
  %v1017 = vadd.f32 %v1014, 1.0
  %v1018 = vadd.f32 %v1016, 1.0
  %v1019 = vrcp.pop %v1017
  %v1020 = vmul.f32 1.0, %v1019
  %v1021 = vrcp.pop %v1018
  %v1022 = vmul.f32 1.0, %v1021
  %v1023 = vmul.f32 %v1001, %v1020
  %v1024 = vmul.f32 %v1006, %v1022
  %v1025 = vlaneseq
  %v1026 = vshrl.u32 %v1025, 7
  %v1027 = vsub.s32 0, %v1026
  %v1028 = vrot.slane %v923, %v1027
  %v1030 = vsel %vm44, %v1023, 0
  %v1033 = vsel %vm44, %v1024, 0
  %1035 = vmatprep.subr.mxu0 0.0
  %1036 = vmatpush1.msra.mxu0 0.0
  %1037 = vmatprep.subr.mxu0 0.0
  %1038 = vmatpush1.msra.mxu0 0.0
  %1039 = vmatprep.subr.mxu0 0.0
  %1040 = vmatpush1.msra.mxu0 0.0
  %1041 = vmatprep.subr.mxu0 0.0
  %1042 = vmatpush1.msra.mxu0 0.0
  %1043 = vmatprep.subr.mxu0 0.0
  %1044 = vmatpush1.msra.mxu0 0.0
  %1045 = vmatprep.subr.mxu0 0.0
  %1046 = vmatpush1.msra.mxu0 0.0
  %1047 = vmatprep.subr.mxu0 0.0
  %1048 = vmatpush1.msra.mxu0 0.0
  %1049 = vmatprep.subr.mxu0 0.0
  %1050 = vmatpush1.msra.mxu0 0.0
  %1051 = vmatprep.subr.mxu0 0.0
  %1052 = vmatpush1.msra.mxu0 %v922
  %1053 = vmatprep.subr.mxu0 0.0
  %1054 = vmatpush1.msra.mxu0 %v921
  %1055 = vmatprep.subr.mxu0 0.0
  %1056 = vmatpush1.msra.mxu0 %v920
  %1057 = vmatprep.subr.mxu0 0.0
  %1058 = vmatpush1.msra.mxu0 %v919
  %1059 = vmatprep.subr.mxu0 0.0
  %1060 = vmatpush1.msra.mxu0 %v918
  %1061 = vmatprep.subr.mxu0 0.0
  %1062 = vmatpush1.msra.mxu0 %v917
  %1063 = vmatprep.subr.mxu0 0.0
  %1064 = vmatpush1.msra.mxu0 %v916
  %1065 = vmatprep.subr.mxu0 0.0
  %1066 = vmatpush1.msra.mxu0 %v915
  %1067 = vmatprep.subr.mxu0 0.0
  %1068 = vmatpush2.msra.mxu0 0.0
  %1069 = vmatprep.subr.mxu0 0.0
  %1070 = vmatpush2.msra.mxu0 0.0
  %1071 = vmatprep.subr.mxu0 0.0
  %1072 = vmatpush2.msra.mxu0 0.0
  %1073 = vmatprep.subr.mxu0 0.0
  %1074 = vmatpush2.msra.mxu0 0.0
  %1075 = vmatprep.subr.mxu0 0.0
  %1076 = vmatpush2.msra.mxu0 0.0
  %1077 = vmatprep.subr.mxu0 0.0
  %1078 = vmatpush2.msra.mxu0 0.0
  %1079 = vmatprep.subr.mxu0 0.0
  %1080 = vmatpush2.msra.mxu0 0.0
  %1081 = vmatprep.subr.mxu0 0.0
  %1082 = vmatpush2.msra.mxu0 0.0
  %1083 = vmatprep.subr.mxu0 0.0
  %1084 = vmatpush2.msra.mxu0 0.0
  %1085 = vmatprep.subr.mxu0 0.0
  %1086 = vmatpush2.msra.mxu0 0.0
  %1087 = vmatprep.subr.mxu0 0.0
  %1088 = vmatpush2.msra.mxu0 0.0
  %1089 = vmatprep.subr.mxu0 0.0
  %1090 = vmatpush2.msra.mxu0 0.0
  %1091 = vmatprep.subr.mxu0 0.0
  %1092 = vmatpush2.msra.mxu0 0.0
  %1093 = vmatprep.subr.mxu0 0.0
  %1094 = vmatpush2.msra.mxu0 0.0
  %1095 = vmatprep.subr.mxu0 0.0
  %1096 = vmatpush2.msra.mxu0 0.0
  %1097 = vmatprep.subr.mxu0 0.0
  %1098 = vmatpush2.msra.mxu0 0.0
  %1099 = vmatprep.mubr.f32.mxu0 0.0
  %1100 = vmatmul.mubr.f32.gmra.mxu0 %v1030
  %v1101 = vpop.f32.mrf.mxu0
  %v1102 = vadd.f32 %v1028, %v1101
  %v1103 = vpop.f32.mrf.mxu0
  %1104 = vmatprep.mubr.f32.mxu0 0.0
  %1105 = vmatmul.mubr.f32.gmra.mxu0 %v1033
  %v1106 = vpop.f32.mrf.mxu0
  %v1107 = vadd.f32 %v1028, %v1106
  %v1108 = vpop.f32.mrf.mxu0
  %1109 = vdwg.mxu0
  %v1110 = vadd.f32 %v878, %v1102
  %v1111 = vadd.f32 %v879, %v1107
  %v1112 = vsel %vm126, %v1110, 0.0
  %1113 = vadd.xlane.f32.xlu0 %v1112
  %v1114 = vpop.xlane.xlu0 %1113
  %v1115 = vsel %vm126, %v1111, 0.0
  %1116 = vadd.xlane.f32.xlu0 %v1115
  %v1117 = vpop.xlane.xlu0 %1116
  %v1118 = vmul.f32 %v1114, %v133
  %v1119 = vmul.f32 %v1117, %v133
  %v1120 = vmul.f32 %v1110, %v1110
  %v1121 = vmul.f32 %v1111, %v1111
  %v1122 = vsel %vm126, %v1120, 0.0
  %1123 = vadd.xlane.f32.xlu0 %v1122
  %v1124 = vpop.xlane.xlu0 %1123
  %v1125 = vsel %vm126, %v1121, 0.0
  %1126 = vadd.xlane.f32.xlu0 %v1125
  %v1127 = vpop.xlane.xlu0 %1126
  %v1128 = vmul.f32 %v1124, %v133
  %v1129 = vmul.f32 %v1127, %v133
  %v1130 = vsub.f32 %v1110, %v1118
  %v1131 = vsub.f32 %v1111, %v1119
  %v1132 = vmul.f32 %v1118, %v1118
  %v1133 = vmul.f32 %v1119, %v1119
  %v1134 = vsub.f32 %v1128, %v1132
  %v1135 = vsub.f32 %v1129, %v1133
  %v1136 = vadd.f32 %v1134, 1e-05
  %v1137 = vadd.f32 %v1135, 1e-05
  %v1138 = vrsqrt.pop %v1136
  %v1139 = vrsqrt.pop %v1137
  %v1140 = vmul.f32 %v1130, %v1138
  %v1141 = vmul.f32 %v1131, %v1139
  %v1142 = vld [vmem:[%s1 + $0x190] sm:$0xff]
  %v1143 = vld [vmem:[%s1 + $0x198] sm:$0xff]
  %v1144 = vld [vmem:[%s1 + $0x1a0] sm:$0xff]
  %v1145 = vld [vmem:[%s1 + $0x1a8] sm:$0xff]
  %v1146 = vld [vmem:[%s1 + $0x1b0] sm:$0x1]
  %v1147 = vlaneseq
  %v1148 = vshrl.u32 %v1147, 7
  %v1149 = vsub.s32 0, %v1148
  %v1150 = vrot.slane %v1146, %v1149
  %v1152 = vsel %vm126, %v1140, 0
  %v1155 = vsel %vm126, %v1141, 0
  %1157 = vmatprep.subr.mxu0 0.0
  %1158 = vmatpush1.msra.mxu0 0.0
  %1159 = vmatprep.subr.mxu0 0.0
  %1160 = vmatpush1.msra.mxu0 0.0
  %1161 = vmatprep.subr.mxu0 0.0
  %1162 = vmatpush1.msra.mxu0 0.0
  %1163 = vmatprep.subr.mxu0 0.0
  %1164 = vmatpush1.msra.mxu0 0.0
  %1165 = vmatprep.subr.mxu0 0.0
  %1166 = vmatpush1.msra.mxu0 0.0
  %1167 = vmatprep.subr.mxu0 0.0
  %1168 = vmatpush1.msra.mxu0 0.0
  %1169 = vmatprep.subr.mxu0 0.0
  %1170 = vmatpush1.msra.mxu0 0.0
  %1171 = vmatprep.subr.mxu0 0.0
  %1172 = vmatpush1.msra.mxu0 0.0
  %1173 = vmatprep.subr.mxu0 0.0
  %1174 = vmatpush1.msra.mxu0 0.0
  %1175 = vmatprep.subr.mxu0 0.0
  %1176 = vmatpush1.msra.mxu0 0.0
  %1177 = vmatprep.subr.mxu0 0.0
  %1178 = vmatpush1.msra.mxu0 0.0
  %1179 = vmatprep.subr.mxu0 0.0
  %1180 = vmatpush1.msra.mxu0 0.0
  %1181 = vmatprep.subr.mxu0 0.0
  %1182 = vmatpush1.msra.mxu0 %v1145
  %1183 = vmatprep.subr.mxu0 0.0
  %1184 = vmatpush1.msra.mxu0 %v1144
  %1185 = vmatprep.subr.mxu0 0.0
  %1186 = vmatpush1.msra.mxu0 %v1143
  %1187 = vmatprep.subr.mxu0 0.0
  %1188 = vmatpush1.msra.mxu0 %v1142
  %1189 = vmatprep.subr.mxu0 0.0
  %1190 = vmatpush2.msra.mxu0 0.0
  %1191 = vmatprep.subr.mxu0 0.0
  %1192 = vmatpush2.msra.mxu0 0.0
  %1193 = vmatprep.subr.mxu0 0.0
  %1194 = vmatpush2.msra.mxu0 0.0
  %1195 = vmatprep.subr.mxu0 0.0
  %1196 = vmatpush2.msra.mxu0 0.0
  %1197 = vmatprep.subr.mxu0 0.0
  %1198 = vmatpush2.msra.mxu0 0.0
  %1199 = vmatprep.subr.mxu0 0.0
  %1200 = vmatpush2.msra.mxu0 0.0
  %1201 = vmatprep.subr.mxu0 0.0
  %1202 = vmatpush2.msra.mxu0 0.0
  %1203 = vmatprep.subr.mxu0 0.0
  %1204 = vmatpush2.msra.mxu0 0.0
  %1205 = vmatprep.subr.mxu0 0.0
  %1206 = vmatpush2.msra.mxu0 0.0
  %1207 = vmatprep.subr.mxu0 0.0
  %1208 = vmatpush2.msra.mxu0 0.0
  %1209 = vmatprep.subr.mxu0 0.0
  %1210 = vmatpush2.msra.mxu0 0.0
  %1211 = vmatprep.subr.mxu0 0.0
  %1212 = vmatpush2.msra.mxu0 0.0
  %1213 = vmatprep.subr.mxu0 0.0
  %1214 = vmatpush2.msra.mxu0 0.0
  %1215 = vmatprep.subr.mxu0 0.0
  %1216 = vmatpush2.msra.mxu0 0.0
  %1217 = vmatprep.subr.mxu0 0.0
  %1218 = vmatpush2.msra.mxu0 0.0
  %1219 = vmatprep.subr.mxu0 0.0
  %1220 = vmatpush2.msra.mxu0 0.0
  %1221 = vmatprep.mubr.f32.mxu0 0.0
  %1222 = vmatmul.mubr.f32.gmra.mxu0 %v1152
  %v1223 = vpop.f32.mrf.mxu0
  %v1224 = vadd.f32 %v1150, %v1223
  %v1225 = vpop.f32.mrf.mxu0
  %1226 = vmatprep.mubr.f32.mxu0 0.0
  %1227 = vmatmul.mubr.f32.gmra.mxu0 %v1155
  %v1228 = vpop.f32.mrf.mxu0
  %v1229 = vadd.f32 %v1150, %v1228
  %v1230 = vpop.f32.mrf.mxu0
  %1231 = vdwg.mxu0
  %1234 = vrot.lane.b32.xlu0 %v1224, 96
  %v1235 = vpop.permute.xlu0 %1234
  %1236 = vrot.lane.b32.xlu0 %v1229, 96
  %v1237 = vpop.permute.xlu0 %1236
  %v1238 = vsel %vm312, %v1224, 0
  %v1240 = vsel %vm312, %v1229, 0
  %v1242 = vsel %vm312, %v1235, 0
  %v1244 = vsel %vm312, %v1237, 0
  %1246 = vmatprep.subr.mxu0 0.0
  %1247 = vmatpush1.xpose.msra.mxu0 0.0
  %1248 = vmatprep.subr.mxu0 0.0
  %1249 = vmatpush1.xpose.msra.mxu0 0.0
  %1250 = vmatprep.subr.mxu0 0.0
  %1251 = vmatpush1.xpose.msra.mxu0 0.0
  %1252 = vmatprep.subr.mxu0 0.0
  %1253 = vmatpush1.xpose.msra.mxu0 0.0
  %1254 = vmatprep.subr.mxu0 0.0
  %1255 = vmatpush1.xpose.msra.mxu0 0.0
  %1256 = vmatprep.subr.mxu0 0.0
  %1257 = vmatpush1.xpose.msra.mxu0 0.0
  %1258 = vmatprep.subr.mxu0 0.0
  %1259 = vmatpush1.xpose.msra.mxu0 0.0
  %1260 = vmatprep.subr.mxu0 0.0
  %1261 = vmatpush1.xpose.msra.mxu0 0.0
  %1262 = vmatprep.subr.mxu0 0.0
  %1263 = vmatpush1.xpose.msra.mxu0 0.0
  %1264 = vmatprep.subr.mxu0 0.0
  %1265 = vmatpush1.xpose.msra.mxu0 0.0
  %1266 = vmatprep.subr.mxu0 0.0
  %1267 = vmatpush1.xpose.msra.mxu0 0.0
  %1268 = vmatprep.subr.mxu0 0.0
  %1269 = vmatpush1.xpose.msra.mxu0 0.0
  %1270 = vmatprep.subr.mxu0 0.0
  %1271 = vmatpush1.xpose.msra.mxu0 0.0
  %1272 = vmatprep.subr.mxu0 0.0
  %1273 = vmatpush1.xpose.msra.mxu0 0.0
  %1274 = vmatprep.subr.mxu0 0.0
  %1275 = vmatpush1.xpose.msra.mxu0 %v1244
  %1276 = vmatprep.subr.mxu0 0.0
  %1277 = vmatpush1.xpose.msra.mxu0 %v1242
  %1278 = vmatprep.subr.mxu0 0.0
  %1279 = vmatpush2.xpose.msra.mxu0 0.0
  %1280 = vmatprep.subr.mxu0 0.0
  %1281 = vmatpush2.xpose.msra.mxu0 0.0
  %1282 = vmatprep.subr.mxu0 0.0
  %1283 = vmatpush2.xpose.msra.mxu0 0.0
  %1284 = vmatprep.subr.mxu0 0.0
  %1285 = vmatpush2.xpose.msra.mxu0 0.0
  %1286 = vmatprep.subr.mxu0 0.0
  %1287 = vmatpush2.xpose.msra.mxu0 0.0
  %1288 = vmatprep.subr.mxu0 0.0
  %1289 = vmatpush2.xpose.msra.mxu0 0.0
  %1290 = vmatprep.subr.mxu0 0.0
  %1291 = vmatpush2.xpose.msra.mxu0 0.0
  %1292 = vmatprep.subr.mxu0 0.0
  %1293 = vmatpush2.xpose.msra.mxu0 0.0
  %1294 = vmatprep.subr.mxu0 0.0
  %1295 = vmatpush2.xpose.msra.mxu0 0.0
  %1296 = vmatprep.subr.mxu0 0.0
  %1297 = vmatpush2.xpose.msra.mxu0 0.0
  %1298 = vmatprep.subr.mxu0 0.0
  %1299 = vmatpush2.xpose.msra.mxu0 0.0
  %1300 = vmatprep.subr.mxu0 0.0
  %1301 = vmatpush2.xpose.msra.mxu0 0.0
  %1302 = vmatprep.subr.mxu0 0.0
  %1303 = vmatpush2.xpose.msra.mxu0 0.0
  %1304 = vmatprep.subr.mxu0 0.0
  %1305 = vmatpush2.xpose.msra.mxu0 0.0
  %1306 = vmatprep.subr.mxu0 0.0
  %1307 = vmatpush2.xpose.msra.mxu0 0.0
  %1308 = vmatprep.subr.mxu0 0.0
  %1309 = vmatpush2.xpose.msra.mxu0 0.0
  %1310 = vmatprep.mubr.f32.mxu0 0.0
  %1311 = vmatmul.mubr.f32.gmra.mxu0 %v1238
  %v1312 = vpop.f32.mrf.mxu0
  %v1313 = vadd.f32 %v184, %v1312
  %v1314 = vpop.f32.mrf.mxu0
  %1315 = vmatprep.mubr.f32.mxu0 0.0
  %1316 = vmatmul.mubr.f32.gmra.mxu0 %v1240
  %v1317 = vpop.f32.mrf.mxu0
  %v1318 = vadd.f32 %v185, %v1317
  %v1319 = vpop.f32.mrf.mxu0
  %1320 = vdwg.mxu0
  %v1321 = vsel %vm312, %v1313, -inf
  %1322 = vmax.xlane.f32.xlu0 %v1321
  %v1323 = vpop.xlane.xlu0 %1322
  %v1324 = vsel %vm312, %v1318, -inf
  %1325 = vmax.xlane.f32.xlu0 %v1324
  %v1326 = vpop.xlane.xlu0 %1325
  %v1327 = vsub.f32 %v1313, %v1323
  %v1328 = vsub.f32 %v1318, %v1326
  %v1329 = vmul.f32 %v1327, 1.442695
  %v1330 = vpow.pop %v1329
  %v1331 = vmul.f32 %v1328, 1.442695
  %v1332 = vpow.pop %v1331
  %v1333 = vsel %vm312, %v1330, 0.0
  %1334 = vadd.xlane.f32.xlu0 %v1333
  %v1335 = vpop.xlane.xlu0 %1334
  %v1336 = vsel %vm312, %v1332, 0.0
  %1337 = vadd.xlane.f32.xlu0 %v1336
  %v1338 = vpop.xlane.xlu0 %1337
  %v1339 = vrcp.pop %v1335
  %v1340 = vrcp.pop %v1338
  %v1341 = vmul.f32 %v1330, %v1339
  %v1342 = vmul.f32 %v1332, %v1340
  %1343 = vrot.lane.b32.xlu0 %v1224, 64
  %v1344 = vpop.permute.xlu0 %1343
  %1345 = vrot.lane.b32.xlu0 %v1229, 64
  %v1346 = vpop.permute.xlu0 %1345
  %v1350 = vsel %vm312, %v1341, 0
  %v1353 = vsel %vm312, %v1342, 0
  %1355 = vmatprep.subr.mxu0 0.0
  %1356 = vmatpush1.msra.mxu0 0.0
  %1357 = vmatprep.subr.mxu0 0.0
  %1358 = vmatpush1.msra.mxu0 0.0
  %1359 = vmatprep.subr.mxu0 0.0
  %1360 = vmatpush1.msra.mxu0 0.0
  %1361 = vmatprep.subr.mxu0 0.0
  %1362 = vmatpush1.msra.mxu0 0.0
  %1363 = vmatprep.subr.mxu0 0.0
  %1364 = vmatpush1.msra.mxu0 0.0
  %1365 = vmatprep.subr.mxu0 0.0
  %1366 = vmatpush1.msra.mxu0 0.0
  %1367 = vmatprep.subr.mxu0 0.0
  %1368 = vmatpush1.msra.mxu0 0.0
  %1369 = vmatprep.subr.mxu0 0.0
  %1370 = vmatpush1.msra.mxu0 0.0
  %1371 = vmatprep.subr.mxu0 0.0
  %1372 = vmatpush1.msra.mxu0 0.0
  %1373 = vmatprep.subr.mxu0 0.0
  %1374 = vmatpush1.msra.mxu0 0.0
  %1375 = vmatprep.subr.mxu0 0.0
  %1376 = vmatpush1.msra.mxu0 0.0
  %1377 = vmatprep.subr.mxu0 0.0
  %1378 = vmatpush1.msra.mxu0 0.0
  %1379 = vmatprep.subr.mxu0 0.0
  %1380 = vmatpush1.msra.mxu0 0.0
  %1381 = vmatprep.subr.mxu0 0.0
  %1382 = vmatpush1.msra.mxu0 0.0
  %1383 = vmatprep.subr.mxu0 0.0
  %1384 = vmatpush1.msra.mxu0 %v1346
  %1385 = vmatprep.subr.mxu0 0.0
  %1386 = vmatpush1.msra.mxu0 %v1344
  %1387 = vmatprep.subr.mxu0 0.0
  %1388 = vmatpush2.msra.mxu0 0.0
  %1389 = vmatprep.subr.mxu0 0.0
  %1390 = vmatpush2.msra.mxu0 0.0
  %1391 = vmatprep.subr.mxu0 0.0
  %1392 = vmatpush2.msra.mxu0 0.0
  %1393 = vmatprep.subr.mxu0 0.0
  %1394 = vmatpush2.msra.mxu0 0.0
  %1395 = vmatprep.subr.mxu0 0.0
  %1396 = vmatpush2.msra.mxu0 0.0
  %1397 = vmatprep.subr.mxu0 0.0
  %1398 = vmatpush2.msra.mxu0 0.0
  %1399 = vmatprep.subr.mxu0 0.0
  %1400 = vmatpush2.msra.mxu0 0.0
  %1401 = vmatprep.subr.mxu0 0.0
  %1402 = vmatpush2.msra.mxu0 0.0
  %1403 = vmatprep.subr.mxu0 0.0
  %1404 = vmatpush2.msra.mxu0 0.0
  %1405 = vmatprep.subr.mxu0 0.0
  %1406 = vmatpush2.msra.mxu0 0.0
  %1407 = vmatprep.subr.mxu0 0.0
  %1408 = vmatpush2.msra.mxu0 0.0
  %1409 = vmatprep.subr.mxu0 0.0
  %1410 = vmatpush2.msra.mxu0 0.0
  %1411 = vmatprep.subr.mxu0 0.0
  %1412 = vmatpush2.msra.mxu0 0.0
  %1413 = vmatprep.subr.mxu0 0.0
  %1414 = vmatpush2.msra.mxu0 0.0
  %1415 = vmatprep.subr.mxu0 0.0
  %1416 = vmatpush2.msra.mxu0 0.0
  %1417 = vmatprep.subr.mxu0 0.0
  %1418 = vmatpush2.msra.mxu0 0.0
  %1419 = vmatprep.mubr.f32.mxu0 0.0
  %1420 = vmatmul.mubr.f32.gmra.mxu0 %v1350
  %v1421 = vpop.f32.mrf.mxu0
  %v1422 = vadd.f32 0.0, %v1421
  %v1423 = vpop.f32.mrf.mxu0
  %1424 = vmatprep.mubr.f32.mxu0 0.0
  %1425 = vmatmul.mubr.f32.gmra.mxu0 %v1353
  %v1426 = vpop.f32.mrf.mxu0
  %v1427 = vadd.f32 0.0, %v1426
  %v1428 = vpop.f32.mrf.mxu0
  %1429 = vdwg.mxu0
  %v1430 = vld [vmem:[%s1 + $0x1b8] sm:$0xff]
  %v1431 = vld [vmem:[%s1 + $0x1c0] sm:$0xff]
  %1432 = vrot.lane.b32.xlu0 %v1224, 112
  %v1433 = vpop.permute.xlu0 %1432
  %1434 = vrot.lane.b32.xlu0 %v1229, 112
  %v1435 = vpop.permute.xlu0 %1434
  %1436 = vrot.lane.b32.xlu0 %v1224, 80
  %v1437 = vpop.permute.xlu0 %1436
  %1438 = vrot.lane.b32.xlu0 %v1229, 80
  %v1439 = vpop.permute.xlu0 %1438
  %v1440 = vsel %vm312, %v1433, 0
  %v1442 = vsel %vm312, %v1435, 0
  %v1444 = vsel %vm312, %v1437, 0
  %v1446 = vsel %vm312, %v1439, 0
  %1448 = vmatprep.subr.mxu0 0.0
  %1449 = vmatpush1.xpose.msra.mxu0 0.0
  %1450 = vmatprep.subr.mxu0 0.0
  %1451 = vmatpush1.xpose.msra.mxu0 0.0
  %1452 = vmatprep.subr.mxu0 0.0
  %1453 = vmatpush1.xpose.msra.mxu0 0.0
  %1454 = vmatprep.subr.mxu0 0.0
  %1455 = vmatpush1.xpose.msra.mxu0 0.0
  %1456 = vmatprep.subr.mxu0 0.0
  %1457 = vmatpush1.xpose.msra.mxu0 0.0
  %1458 = vmatprep.subr.mxu0 0.0
  %1459 = vmatpush1.xpose.msra.mxu0 0.0
  %1460 = vmatprep.subr.mxu0 0.0
  %1461 = vmatpush1.xpose.msra.mxu0 0.0
  %1462 = vmatprep.subr.mxu0 0.0
  %1463 = vmatpush1.xpose.msra.mxu0 0.0
  %1464 = vmatprep.subr.mxu0 0.0
  %1465 = vmatpush1.xpose.msra.mxu0 0.0
  %1466 = vmatprep.subr.mxu0 0.0
  %1467 = vmatpush1.xpose.msra.mxu0 0.0
  %1468 = vmatprep.subr.mxu0 0.0
  %1469 = vmatpush1.xpose.msra.mxu0 0.0
  %1470 = vmatprep.subr.mxu0 0.0
  %1471 = vmatpush1.xpose.msra.mxu0 0.0
  %1472 = vmatprep.subr.mxu0 0.0
  %1473 = vmatpush1.xpose.msra.mxu0 0.0
  %1474 = vmatprep.subr.mxu0 0.0
  %1475 = vmatpush1.xpose.msra.mxu0 0.0
  %1476 = vmatprep.subr.mxu0 0.0
  %1477 = vmatpush1.xpose.msra.mxu0 %v1446
  %1478 = vmatprep.subr.mxu0 0.0
  %1479 = vmatpush1.xpose.msra.mxu0 %v1444
  %1480 = vmatprep.subr.mxu0 0.0
  %1481 = vmatpush2.xpose.msra.mxu0 0.0
  %1482 = vmatprep.subr.mxu0 0.0
  %1483 = vmatpush2.xpose.msra.mxu0 0.0
  %1484 = vmatprep.subr.mxu0 0.0
  %1485 = vmatpush2.xpose.msra.mxu0 0.0
  %1486 = vmatprep.subr.mxu0 0.0
  %1487 = vmatpush2.xpose.msra.mxu0 0.0
  %1488 = vmatprep.subr.mxu0 0.0
  %1489 = vmatpush2.xpose.msra.mxu0 0.0
  %1490 = vmatprep.subr.mxu0 0.0
  %1491 = vmatpush2.xpose.msra.mxu0 0.0
  %1492 = vmatprep.subr.mxu0 0.0
  %1493 = vmatpush2.xpose.msra.mxu0 0.0
  %1494 = vmatprep.subr.mxu0 0.0
  %1495 = vmatpush2.xpose.msra.mxu0 0.0
  %1496 = vmatprep.subr.mxu0 0.0
  %1497 = vmatpush2.xpose.msra.mxu0 0.0
  %1498 = vmatprep.subr.mxu0 0.0
  %1499 = vmatpush2.xpose.msra.mxu0 0.0
  %1500 = vmatprep.subr.mxu0 0.0
  %1501 = vmatpush2.xpose.msra.mxu0 0.0
  %1502 = vmatprep.subr.mxu0 0.0
  %1503 = vmatpush2.xpose.msra.mxu0 0.0
  %1504 = vmatprep.subr.mxu0 0.0
  %1505 = vmatpush2.xpose.msra.mxu0 0.0
  %1506 = vmatprep.subr.mxu0 0.0
  %1507 = vmatpush2.xpose.msra.mxu0 0.0
  %1508 = vmatprep.subr.mxu0 0.0
  %1509 = vmatpush2.xpose.msra.mxu0 0.0
  %1510 = vmatprep.subr.mxu0 0.0
  %1511 = vmatpush2.xpose.msra.mxu0 0.0
  %1512 = vmatprep.mubr.f32.mxu0 0.0
  %1513 = vmatmul.mubr.f32.gmra.mxu0 %v1440
  %v1514 = vpop.f32.mrf.mxu0
  %v1515 = vadd.f32 %v184, %v1514
  %v1516 = vpop.f32.mrf.mxu0
  %1517 = vmatprep.mubr.f32.mxu0 0.0
  %1518 = vmatmul.mubr.f32.gmra.mxu0 %v1442
  %v1519 = vpop.f32.mrf.mxu0
  %v1520 = vadd.f32 %v185, %v1519
  %v1521 = vpop.f32.mrf.mxu0
  %1522 = vdwg.mxu0
  %v1523 = vsel %vm312, %v1515, -inf
  %1524 = vmax.xlane.f32.xlu0 %v1523
  %v1525 = vpop.xlane.xlu0 %1524
  %v1526 = vsel %vm312, %v1520, -inf
  %1527 = vmax.xlane.f32.xlu0 %v1526
  %v1528 = vpop.xlane.xlu0 %1527
  %v1529 = vsub.f32 %v1515, %v1525
  %v1530 = vsub.f32 %v1520, %v1528
  %v1531 = vmul.f32 %v1529, 1.442695
  %v1532 = vpow.pop %v1531
  %v1533 = vmul.f32 %v1530, 1.442695
  %v1534 = vpow.pop %v1533
  %v1535 = vsel %vm312, %v1532, 0.0
  %1536 = vadd.xlane.f32.xlu0 %v1535
  %v1537 = vpop.xlane.xlu0 %1536
  %v1538 = vsel %vm312, %v1534, 0.0
  %1539 = vadd.xlane.f32.xlu0 %v1538
  %v1540 = vpop.xlane.xlu0 %1539
  %v1541 = vrcp.pop %v1537
  %v1542 = vrcp.pop %v1540
  %v1543 = vmul.f32 %v1532, %v1541
  %v1544 = vmul.f32 %v1534, %v1542
  %1545 = vrot.lane.b32.xlu0 %v1224, 48
  %v1546 = vpop.permute.xlu0 %1545
  %1547 = vrot.lane.b32.xlu0 %v1229, 48
  %v1548 = vpop.permute.xlu0 %1547
  %v1552 = vsel %vm312, %v1543, 0
  %v1555 = vsel %vm312, %v1544, 0
  %1557 = vmatprep.subr.mxu0 0.0
  %1558 = vmatpush1.msra.mxu0 0.0
  %1559 = vmatprep.subr.mxu0 0.0
  %1560 = vmatpush1.msra.mxu0 0.0
  %1561 = vmatprep.subr.mxu0 0.0
  %1562 = vmatpush1.msra.mxu0 0.0
  %1563 = vmatprep.subr.mxu0 0.0
  %1564 = vmatpush1.msra.mxu0 0.0
  %1565 = vmatprep.subr.mxu0 0.0
  %1566 = vmatpush1.msra.mxu0 0.0
  %1567 = vmatprep.subr.mxu0 0.0
  %1568 = vmatpush1.msra.mxu0 0.0
  %1569 = vmatprep.subr.mxu0 0.0
  %1570 = vmatpush1.msra.mxu0 0.0
  %1571 = vmatprep.subr.mxu0 0.0
  %1572 = vmatpush1.msra.mxu0 0.0
  %1573 = vmatprep.subr.mxu0 0.0
  %1574 = vmatpush1.msra.mxu0 0.0
  %1575 = vmatprep.subr.mxu0 0.0
  %1576 = vmatpush1.msra.mxu0 0.0
  %1577 = vmatprep.subr.mxu0 0.0
  %1578 = vmatpush1.msra.mxu0 0.0
  %1579 = vmatprep.subr.mxu0 0.0
  %1580 = vmatpush1.msra.mxu0 0.0
  %1581 = vmatprep.subr.mxu0 0.0
  %1582 = vmatpush1.msra.mxu0 0.0
  %1583 = vmatprep.subr.mxu0 0.0
  %1584 = vmatpush1.msra.mxu0 0.0
  %1585 = vmatprep.subr.mxu0 0.0
  %1586 = vmatpush1.msra.mxu0 %v1548
  %1587 = vmatprep.subr.mxu0 0.0
  %1588 = vmatpush1.msra.mxu0 %v1546
  %1589 = vmatprep.subr.mxu0 0.0
  %1590 = vmatpush2.msra.mxu0 0.0
  %1591 = vmatprep.subr.mxu0 0.0
  %1592 = vmatpush2.msra.mxu0 0.0
  %1593 = vmatprep.subr.mxu0 0.0
  %1594 = vmatpush2.msra.mxu0 0.0
  %1595 = vmatprep.subr.mxu0 0.0
  %1596 = vmatpush2.msra.mxu0 0.0
  %1597 = vmatprep.subr.mxu0 0.0
  %1598 = vmatpush2.msra.mxu0 0.0
  %1599 = vmatprep.subr.mxu0 0.0
  %1600 = vmatpush2.msra.mxu0 0.0
  %1601 = vmatprep.subr.mxu0 0.0
  %1602 = vmatpush2.msra.mxu0 0.0
  %1603 = vmatprep.subr.mxu0 0.0
  %1604 = vmatpush2.msra.mxu0 0.0
  %1605 = vmatprep.subr.mxu0 0.0
  %1606 = vmatpush2.msra.mxu0 0.0
  %1607 = vmatprep.subr.mxu0 0.0
  %1608 = vmatpush2.msra.mxu0 0.0
  %1609 = vmatprep.subr.mxu0 0.0
  %1610 = vmatpush2.msra.mxu0 0.0
  %1611 = vmatprep.subr.mxu0 0.0
  %1612 = vmatpush2.msra.mxu0 0.0
  %1613 = vmatprep.subr.mxu0 0.0
  %1614 = vmatpush2.msra.mxu0 0.0
  %1615 = vmatprep.subr.mxu0 0.0
  %1616 = vmatpush2.msra.mxu0 0.0
  %1617 = vmatprep.subr.mxu0 0.0
  %1618 = vmatpush2.msra.mxu0 0.0
  %1619 = vmatprep.subr.mxu0 0.0
  %1620 = vmatpush2.msra.mxu0 0.0
  %1621 = vmatprep.mubr.f32.mxu0 0.0
  %1622 = vmatmul.mubr.f32.gmra.mxu0 %v1552
  %v1623 = vpop.f32.mrf.mxu0
  %v1624 = vadd.f32 0.0, %v1623
  %v1625 = vpop.f32.mrf.mxu0
  %1626 = vmatprep.mubr.f32.mxu0 0.0
  %1627 = vmatmul.mubr.f32.gmra.mxu0 %v1555
  %v1628 = vpop.f32.mrf.mxu0
  %v1629 = vadd.f32 0.0, %v1628
  %v1630 = vpop.f32.mrf.mxu0
  %1631 = vdwg.mxu0
  %v1632 = vld [vmem:[%s1 + $0x1c8] sm:$0xff]
  %v1633 = vld [vmem:[%s1 + $0x1d0] sm:$0xff]
  %v1635 = vsel %vm312, %v1624, 0
  %v1638 = vsel %vm312, %v1629, 0
  %1640 = vmatprep.subr.mxu0 0.0
  %1641 = vmatpush1.msra.mxu0 0.0
  %1642 = vmatprep.subr.mxu0 0.0
  %1643 = vmatpush1.msra.mxu0 0.0
  %1644 = vmatprep.subr.mxu0 0.0
  %1645 = vmatpush1.msra.mxu0 0.0
  %1646 = vmatprep.subr.mxu0 0.0
  %1647 = vmatpush1.msra.mxu0 0.0
  %1648 = vmatprep.subr.mxu0 0.0
  %1649 = vmatpush1.msra.mxu0 0.0
  %1650 = vmatprep.subr.mxu0 0.0
  %1651 = vmatpush1.msra.mxu0 0.0
  %1652 = vmatprep.subr.mxu0 0.0
  %1653 = vmatpush1.msra.mxu0 0.0
  %1654 = vmatprep.subr.mxu0 0.0
  %1655 = vmatpush1.msra.mxu0 0.0
  %1656 = vmatprep.subr.mxu0 0.0
  %1657 = vmatpush1.msra.mxu0 0.0
  %1658 = vmatprep.subr.mxu0 0.0
  %1659 = vmatpush1.msra.mxu0 0.0
  %1660 = vmatprep.subr.mxu0 0.0
  %1661 = vmatpush1.msra.mxu0 0.0
  %1662 = vmatprep.subr.mxu0 0.0
  %1663 = vmatpush1.msra.mxu0 0.0
  %1664 = vmatprep.subr.mxu0 0.0
  %1665 = vmatpush1.msra.mxu0 0.0
  %1666 = vmatprep.subr.mxu0 0.0
  %1667 = vmatpush1.msra.mxu0 0.0
  %1668 = vmatprep.subr.mxu0 0.0
  %1669 = vmatpush1.msra.mxu0 %v1633
  %1670 = vmatprep.subr.mxu0 0.0
  %1671 = vmatpush1.msra.mxu0 %v1632
  %1672 = vmatprep.subr.mxu0 0.0
  %1673 = vmatpush2.msra.mxu0 0.0
  %1674 = vmatprep.subr.mxu0 0.0
  %1675 = vmatpush2.msra.mxu0 0.0
  %1676 = vmatprep.subr.mxu0 0.0
  %1677 = vmatpush2.msra.mxu0 0.0
  %1678 = vmatprep.subr.mxu0 0.0
  %1679 = vmatpush2.msra.mxu0 0.0
  %1680 = vmatprep.subr.mxu0 0.0
  %1681 = vmatpush2.msra.mxu0 0.0
  %1682 = vmatprep.subr.mxu0 0.0
  %1683 = vmatpush2.msra.mxu0 0.0
  %1684 = vmatprep.subr.mxu0 0.0
  %1685 = vmatpush2.msra.mxu0 0.0
  %1686 = vmatprep.subr.mxu0 0.0
  %1687 = vmatpush2.msra.mxu0 0.0
  %1688 = vmatprep.subr.mxu0 0.0
  %1689 = vmatpush2.msra.mxu0 0.0
  %1690 = vmatprep.subr.mxu0 0.0
  %1691 = vmatpush2.msra.mxu0 0.0
  %1692 = vmatprep.subr.mxu0 0.0
  %1693 = vmatpush2.msra.mxu0 0.0
  %1694 = vmatprep.subr.mxu0 0.0
  %1695 = vmatpush2.msra.mxu0 0.0
  %1696 = vmatprep.subr.mxu0 0.0
  %1697 = vmatpush2.msra.mxu0 0.0
  %1698 = vmatprep.subr.mxu0 0.0
  %1699 = vmatpush2.msra.mxu0 0.0
  %1700 = vmatprep.subr.mxu0 0.0
  %1701 = vmatpush2.msra.mxu0 0.0
  %1702 = vmatprep.subr.mxu0 0.0
  %1703 = vmatpush2.msra.mxu0 0.0
  %1704 = vmatprep.mubr.f32.mxu0 0.0
  %1705 = vmatmul.mubr.f32.gmra.mxu0 %v1635
  %v1706 = vpop.f32.mrf.mxu0
  %v1707 = vadd.f32 0.0, %v1706
  %v1708 = vpop.f32.mrf.mxu0
  %1709 = vmatprep.mubr.f32.mxu0 0.0
  %1710 = vmatmul.mubr.f32.gmra.mxu0 %v1638
  %v1711 = vpop.f32.mrf.mxu0
  %v1712 = vadd.f32 0.0, %v1711
  %v1713 = vpop.f32.mrf.mxu0
  %1714 = vdwg.mxu0
  %v1716 = vsel %vm312, %v1422, 0
  %v1719 = vsel %vm312, %v1427, 0
  %1721 = vmatprep.subr.mxu0 0.0
  %1722 = vmatpush1.msra.mxu0 0.0
  %1723 = vmatprep.subr.mxu0 0.0
  %1724 = vmatpush1.msra.mxu0 0.0
  %1725 = vmatprep.subr.mxu0 0.0
  %1726 = vmatpush1.msra.mxu0 0.0
  %1727 = vmatprep.subr.mxu0 0.0
  %1728 = vmatpush1.msra.mxu0 0.0
  %1729 = vmatprep.subr.mxu0 0.0
  %1730 = vmatpush1.msra.mxu0 0.0
  %1731 = vmatprep.subr.mxu0 0.0
  %1732 = vmatpush1.msra.mxu0 0.0
  %1733 = vmatprep.subr.mxu0 0.0
  %1734 = vmatpush1.msra.mxu0 0.0
  %1735 = vmatprep.subr.mxu0 0.0
  %1736 = vmatpush1.msra.mxu0 0.0
  %1737 = vmatprep.subr.mxu0 0.0
  %1738 = vmatpush1.msra.mxu0 0.0
  %1739 = vmatprep.subr.mxu0 0.0
  %1740 = vmatpush1.msra.mxu0 0.0
  %1741 = vmatprep.subr.mxu0 0.0
  %1742 = vmatpush1.msra.mxu0 0.0
  %1743 = vmatprep.subr.mxu0 0.0
  %1744 = vmatpush1.msra.mxu0 0.0
  %1745 = vmatprep.subr.mxu0 0.0
  %1746 = vmatpush1.msra.mxu0 0.0
  %1747 = vmatprep.subr.mxu0 0.0
  %1748 = vmatpush1.msra.mxu0 0.0
  %1749 = vmatprep.subr.mxu0 0.0
  %1750 = vmatpush1.msra.mxu0 %v1431
  %1751 = vmatprep.subr.mxu0 0.0
  %1752 = vmatpush1.msra.mxu0 %v1430
  %1753 = vmatprep.subr.mxu0 0.0
  %1754 = vmatpush2.msra.mxu0 0.0
  %1755 = vmatprep.subr.mxu0 0.0
  %1756 = vmatpush2.msra.mxu0 0.0
  %1757 = vmatprep.subr.mxu0 0.0
  %1758 = vmatpush2.msra.mxu0 0.0
  %1759 = vmatprep.subr.mxu0 0.0
  %1760 = vmatpush2.msra.mxu0 0.0
  %1761 = vmatprep.subr.mxu0 0.0
  %1762 = vmatpush2.msra.mxu0 0.0
  %1763 = vmatprep.subr.mxu0 0.0
  %1764 = vmatpush2.msra.mxu0 0.0
  %1765 = vmatprep.subr.mxu0 0.0
  %1766 = vmatpush2.msra.mxu0 0.0
  %1767 = vmatprep.subr.mxu0 0.0
  %1768 = vmatpush2.msra.mxu0 0.0
  %1769 = vmatprep.subr.mxu0 0.0
  %1770 = vmatpush2.msra.mxu0 0.0
  %1771 = vmatprep.subr.mxu0 0.0
  %1772 = vmatpush2.msra.mxu0 0.0
  %1773 = vmatprep.subr.mxu0 0.0
  %1774 = vmatpush2.msra.mxu0 0.0
  %1775 = vmatprep.subr.mxu0 0.0
  %1776 = vmatpush2.msra.mxu0 0.0
  %1777 = vmatprep.subr.mxu0 0.0
  %1778 = vmatpush2.msra.mxu0 0.0
  %1779 = vmatprep.subr.mxu0 0.0
  %1780 = vmatpush2.msra.mxu0 0.0
  %1781 = vmatprep.subr.mxu0 0.0
  %1782 = vmatpush2.msra.mxu0 0.0
  %1783 = vmatprep.subr.mxu0 0.0
  %1784 = vmatpush2.msra.mxu0 0.0
  %1785 = vmatprep.mubr.f32.mxu0 0.0
  %1786 = vmatmul.mubr.f32.gmra.mxu0 %v1716
  %v1787 = vpop.f32.mrf.mxu0
  %v1788 = vadd.f32 %v1707, %v1787
  %v1789 = vpop.f32.mrf.mxu0
  %1790 = vmatprep.mubr.f32.mxu0 0.0
  %1791 = vmatmul.mubr.f32.gmra.mxu0 %v1719
  %v1792 = vpop.f32.mrf.mxu0
  %v1793 = vadd.f32 %v1712, %v1792
  %v1794 = vpop.f32.mrf.mxu0
  %1795 = vdwg.mxu0
  %v1796 = vld [vmem:[%s1 + $0x1d8] sm:$0x1]
  %v1797 = vadd.f32 %v1110, %v1788
  %v1798 = vadd.f32 %v1111, %v1793
  %v1799 = vlaneseq
  %v1800 = vshrl.u32 %v1799, 7
  %v1801 = vsub.s32 0, %v1800
  %v1802 = vrot.slane %v1796, %v1801
  %v1803 = vadd.f32 %v1797, %v1802
  %v1804 = vadd.f32 %v1798, %v1802
  %v1805 = vsel %vm126, %v1803, 0.0
  %1806 = vadd.xlane.f32.xlu0 %v1805
  %v1807 = vpop.xlane.xlu0 %1806
  %v1808 = vsel %vm126, %v1804, 0.0
  %1809 = vadd.xlane.f32.xlu0 %v1808
  %v1810 = vpop.xlane.xlu0 %1809
  %v1811 = vmul.f32 %v1807, %v133
  %v1812 = vmul.f32 %v1810, %v133
  %v1813 = vmul.f32 %v1803, %v1803
  %v1814 = vmul.f32 %v1804, %v1804
  %v1815 = vsel %vm126, %v1813, 0.0
  %1816 = vadd.xlane.f32.xlu0 %v1815
  %v1817 = vpop.xlane.xlu0 %1816
  %v1818 = vsel %vm126, %v1814, 0.0
  %1819 = vadd.xlane.f32.xlu0 %v1818
  %v1820 = vpop.xlane.xlu0 %1819
  %v1821 = vmul.f32 %v1817, %v133
  %v1822 = vmul.f32 %v1820, %v133
  %v1823 = vsub.f32 %v1803, %v1811
  %v1824 = vsub.f32 %v1804, %v1812
  %v1825 = vmul.f32 %v1811, %v1811
  %v1826 = vmul.f32 %v1812, %v1812
  %v1827 = vsub.f32 %v1821, %v1825
  %v1828 = vsub.f32 %v1822, %v1826
  %v1829 = vadd.f32 %v1827, 1e-05
  %v1830 = vadd.f32 %v1828, 1e-05
  %v1831 = vrsqrt.pop %v1829
  %v1832 = vrsqrt.pop %v1830
  %v1833 = vmul.f32 %v1823, %v1831
  %v1834 = vmul.f32 %v1824, %v1832
  %v1835 = vld [vmem:[%s1 + $0x1e0] sm:$0xff]
  %v1836 = vld [vmem:[%s1 + $0x1e8] sm:$0xff]
  %v1837 = vld [vmem:[%s1 + $0x1f0] sm:$0xff]
  %v1838 = vld [vmem:[%s1 + $0x1f8] sm:$0xff]
  %v1839 = vld [vmem:[%s1 + $0x200] sm:$0x1]
  %v1840 = vld [vmem:[%s1 + $0x208] sm:$0xff]
  %v1841 = vld [vmem:[%s1 + $0x210] sm:$0xff]
  %v1842 = vld [vmem:[%s1 + $0x218] sm:$0xff]
  %v1843 = vld [vmem:[%s1 + $0x220] sm:$0xff]
  %v1844 = vld [vmem:[%s1 + $0x228] sm:$0xff]
  %v1845 = vld [vmem:[%s1 + $0x230] sm:$0xff]
  %v1846 = vld [vmem:[%s1 + $0x238] sm:$0xff]
  %v1847 = vld [vmem:[%s1 + $0x240] sm:$0xff]
  %v1848 = vld [vmem:[%s1 + $0x248] sm:$0x1]
  %v1849 = vlaneseq
  %v1850 = vshrl.u32 %v1849, 7
  %v1851 = vsub.s32 0, %v1850
  %v1852 = vrot.slane %v1839, %v1851
  %v1854 = vsel %vm126, %v1833, 0
  %v1857 = vsel %vm126, %v1834, 0
  %1859 = vmatprep.subr.mxu0 0.0
  %1860 = vmatpush1.msra.mxu0 0.0
  %1861 = vmatprep.subr.mxu0 0.0
  %1862 = vmatpush1.msra.mxu0 0.0
  %1863 = vmatprep.subr.mxu0 0.0
  %1864 = vmatpush1.msra.mxu0 0.0
  %1865 = vmatprep.subr.mxu0 0.0
  %1866 = vmatpush1.msra.mxu0 0.0
  %1867 = vmatprep.subr.mxu0 0.0
  %1868 = vmatpush1.msra.mxu0 0.0
  %1869 = vmatprep.subr.mxu0 0.0
  %1870 = vmatpush1.msra.mxu0 0.0
  %1871 = vmatprep.subr.mxu0 0.0
  %1872 = vmatpush1.msra.mxu0 0.0
  %1873 = vmatprep.subr.mxu0 0.0
  %1874 = vmatpush1.msra.mxu0 0.0
  %1875 = vmatprep.subr.mxu0 0.0
  %1876 = vmatpush1.msra.mxu0 0.0
  %1877 = vmatprep.subr.mxu0 0.0
  %1878 = vmatpush1.msra.mxu0 0.0
  %1879 = vmatprep.subr.mxu0 0.0
  %1880 = vmatpush1.msra.mxu0 0.0
  %1881 = vmatprep.subr.mxu0 0.0
  %1882 = vmatpush1.msra.mxu0 0.0
  %1883 = vmatprep.subr.mxu0 0.0
  %1884 = vmatpush1.msra.mxu0 %v1838
  %1885 = vmatprep.subr.mxu0 0.0
  %1886 = vmatpush1.msra.mxu0 %v1837
  %1887 = vmatprep.subr.mxu0 0.0
  %1888 = vmatpush1.msra.mxu0 %v1836
  %1889 = vmatprep.subr.mxu0 0.0
  %1890 = vmatpush1.msra.mxu0 %v1835
  %1891 = vmatprep.subr.mxu0 0.0
  %1892 = vmatpush2.msra.mxu0 0.0
  %1893 = vmatprep.subr.mxu0 0.0
  %1894 = vmatpush2.msra.mxu0 0.0
  %1895 = vmatprep.subr.mxu0 0.0
  %1896 = vmatpush2.msra.mxu0 0.0
  %1897 = vmatprep.subr.mxu0 0.0
  %1898 = vmatpush2.msra.mxu0 0.0
  %1899 = vmatprep.subr.mxu0 0.0
  %1900 = vmatpush2.msra.mxu0 0.0
  %1901 = vmatprep.subr.mxu0 0.0
  %1902 = vmatpush2.msra.mxu0 0.0
  %1903 = vmatprep.subr.mxu0 0.0
  %1904 = vmatpush2.msra.mxu0 0.0
  %1905 = vmatprep.subr.mxu0 0.0
  %1906 = vmatpush2.msra.mxu0 0.0
  %1907 = vmatprep.subr.mxu0 0.0
  %1908 = vmatpush2.msra.mxu0 0.0
  %1909 = vmatprep.subr.mxu0 0.0
  %1910 = vmatpush2.msra.mxu0 0.0
  %1911 = vmatprep.subr.mxu0 0.0
  %1912 = vmatpush2.msra.mxu0 0.0
  %1913 = vmatprep.subr.mxu0 0.0
  %1914 = vmatpush2.msra.mxu0 0.0
  %1915 = vmatprep.subr.mxu0 0.0
  %1916 = vmatpush2.msra.mxu0 0.0
  %1917 = vmatprep.subr.mxu0 0.0
  %1918 = vmatpush2.msra.mxu0 0.0
  %1919 = vmatprep.subr.mxu0 0.0
  %1920 = vmatpush2.msra.mxu0 0.0
  %1921 = vmatprep.subr.mxu0 0.0
  %1922 = vmatpush2.msra.mxu0 0.0
  %1923 = vmatprep.mubr.f32.mxu0 0.0
  %1924 = vmatmul.mubr.f32.gmra.mxu0 %v1854
  %v1925 = vpop.f32.mrf.mxu0
  %v1926 = vadd.f32 %v1852, %v1925
  %v1927 = vpop.f32.mrf.mxu0
  %1928 = vmatprep.mubr.f32.mxu0 0.0
  %1929 = vmatmul.mubr.f32.gmra.mxu0 %v1857
  %v1930 = vpop.f32.mrf.mxu0
  %v1931 = vadd.f32 %v1852, %v1930
  %v1932 = vpop.f32.mrf.mxu0
  %1933 = vdwg.mxu0
  %v1934 = vmul.f32 %v1926, 1.702
  %v1935 = vmul.f32 %v1931, 1.702
  %v1936 = vxor.u32 %v1934, 2147483648
  %v1937 = vxor.u32 %v1935, 2147483648
  %v1938 = vmul.f32 %v1936, 1.442695
  %v1939 = vpow.pop %v1938
  %v1940 = vmul.f32 %v1937, 1.442695
  %v1941 = vpow.pop %v1940
  %v1942 = vadd.f32 %v1939, 1.0
  %v1943 = vadd.f32 %v1941, 1.0
  %v1944 = vrcp.pop %v1942
  %v1945 = vmul.f32 1.0, %v1944
  %v1946 = vrcp.pop %v1943
  %v1947 = vmul.f32 1.0, %v1946
  %v1948 = vmul.f32 %v1926, %v1945
  %v1949 = vmul.f32 %v1931, %v1947
  %v1950 = vlaneseq
  %v1951 = vshrl.u32 %v1950, 7
  %v1952 = vsub.s32 0, %v1951
  %v1953 = vrot.slane %v1848, %v1952
  %v1955 = vsel %vm44, %v1948, 0
  %v1958 = vsel %vm44, %v1949, 0
  %1960 = vmatprep.subr.mxu0 0.0
  %1961 = vmatpush1.msra.mxu0 0.0
  %1962 = vmatprep.subr.mxu0 0.0
  %1963 = vmatpush1.msra.mxu0 0.0
  %1964 = vmatprep.subr.mxu0 0.0
  %1965 = vmatpush1.msra.mxu0 0.0
  %1966 = vmatprep.subr.mxu0 0.0
  %1967 = vmatpush1.msra.mxu0 0.0
  %1968 = vmatprep.subr.mxu0 0.0
  %1969 = vmatpush1.msra.mxu0 0.0
  %1970 = vmatprep.subr.mxu0 0.0
  %1971 = vmatpush1.msra.mxu0 0.0
  %1972 = vmatprep.subr.mxu0 0.0
  %1973 = vmatpush1.msra.mxu0 0.0
  %1974 = vmatprep.subr.mxu0 0.0
  %1975 = vmatpush1.msra.mxu0 0.0
  %1976 = vmatprep.subr.mxu0 0.0
  %1977 = vmatpush1.msra.mxu0 %v1847
  %1978 = vmatprep.subr.mxu0 0.0
  %1979 = vmatpush1.msra.mxu0 %v1846
  %1980 = vmatprep.subr.mxu0 0.0
  %1981 = vmatpush1.msra.mxu0 %v1845
  %1982 = vmatprep.subr.mxu0 0.0
  %1983 = vmatpush1.msra.mxu0 %v1844
  %1984 = vmatprep.subr.mxu0 0.0
  %1985 = vmatpush1.msra.mxu0 %v1843
  %1986 = vmatprep.subr.mxu0 0.0
  %1987 = vmatpush1.msra.mxu0 %v1842
  %1988 = vmatprep.subr.mxu0 0.0
  %1989 = vmatpush1.msra.mxu0 %v1841
  %1990 = vmatprep.subr.mxu0 0.0
  %1991 = vmatpush1.msra.mxu0 %v1840
  %1992 = vmatprep.subr.mxu0 0.0
  %1993 = vmatpush2.msra.mxu0 0.0
  %1994 = vmatprep.subr.mxu0 0.0
  %1995 = vmatpush2.msra.mxu0 0.0
  %1996 = vmatprep.subr.mxu0 0.0
  %1997 = vmatpush2.msra.mxu0 0.0
  %1998 = vmatprep.subr.mxu0 0.0
  %1999 = vmatpush2.msra.mxu0 0.0
  %2000 = vmatprep.subr.mxu0 0.0
  %2001 = vmatpush2.msra.mxu0 0.0
  %2002 = vmatprep.subr.mxu0 0.0
  %2003 = vmatpush2.msra.mxu0 0.0
  %2004 = vmatprep.subr.mxu0 0.0
  %2005 = vmatpush2.msra.mxu0 0.0
  %2006 = vmatprep.subr.mxu0 0.0
  %2007 = vmatpush2.msra.mxu0 0.0
  %2008 = vmatprep.subr.mxu0 0.0
  %2009 = vmatpush2.msra.mxu0 0.0
  %2010 = vmatprep.subr.mxu0 0.0
  %2011 = vmatpush2.msra.mxu0 0.0
  %2012 = vmatprep.subr.mxu0 0.0
  %2013 = vmatpush2.msra.mxu0 0.0
  %2014 = vmatprep.subr.mxu0 0.0
  %2015 = vmatpush2.msra.mxu0 0.0
  %2016 = vmatprep.subr.mxu0 0.0
  %2017 = vmatpush2.msra.mxu0 0.0
  %2018 = vmatprep.subr.mxu0 0.0
  %2019 = vmatpush2.msra.mxu0 0.0
  %2020 = vmatprep.subr.mxu0 0.0
  %2021 = vmatpush2.msra.mxu0 0.0
  %2022 = vmatprep.subr.mxu0 0.0
  %2023 = vmatpush2.msra.mxu0 0.0
  %2024 = vmatprep.mubr.f32.mxu0 0.0
  %2025 = vmatmul.mubr.f32.gmra.mxu0 %v1955
  %v2026 = vpop.f32.mrf.mxu0
  %v2027 = vadd.f32 %v1953, %v2026
  %v2028 = vpop.f32.mrf.mxu0
  %2029 = vmatprep.mubr.f32.mxu0 0.0
  %2030 = vmatmul.mubr.f32.gmra.mxu0 %v1958
  %v2031 = vpop.f32.mrf.mxu0
  %v2032 = vadd.f32 %v1953, %v2031
  %v2033 = vpop.f32.mrf.mxu0
  %2034 = vdwg.mxu0
  %v2035 = vadd.f32 %v1803, %v2027
  %v2036 = vadd.f32 %v1804, %v2032
  %v2038 = vrot.slane %v2036, 7
  %vm2040 = vcmask 1040384
  %v2041 = vsel %vm2040, %v2035, %v2038
  %vm2042 = vcmask 254976
  %v2043 = vsel %vm2042, %v2041, 0.0
  %2044 = vadd.xlane.f32.xlu0 %v2043
  %v2045 = vpop.xlane.xlu0 %2044
  %v2046 = vmul.f32 %v2045, %v133
  %v2047 = vmul.f32 %v2041, %v2041
  %v2048 = vsel %vm2042, %v2047, 0.0
  %2049 = vadd.xlane.f32.xlu0 %v2048
  %v2050 = vpop.xlane.xlu0 %2049
  %v2051 = vmul.f32 %v2050, %v133
  %v2052 = vsub.f32 %v2041, %v2046
  %v2053 = vmul.f32 %v2046, %v2046
  %v2054 = vsub.f32 %v2051, %v2053
  %v2055 = vadd.f32 %v2054, 1e-05
  %v2056 = vrsqrt.pop %v2055
  %v2057 = vmul.f32 %v2052, %v2056
  %v2058 = vlaneseq
  %v2059 = vshrl.u32 %v2058, 7
  %v2060 = vsub.s32 0, %v2059
  %v2061 = vrot.slane %v38, %v2060
  %v2062 = vmul.f32 %v2057, %v2061
  %v2063 = vsel %vm2042, %v2062, 0.0
  %2064 = vadd.xlane.f32.xlu0 %v2063
  %v2065 = vpop.xlane.xlu0 %2064
  %v2066 = vlaneseq
  %v2067 = vshrl.u32 %v2066, 7
  %v2068 = vsub.s32 0, %v2067
  %v2069 = vrot.slane %v39, %v2068
  %v2070 = vadd.f32 %v2065, %v2069
  %v2071 = vxor.u32 %v2070, 2147483648
  %v2072 = vmul.f32 %v2071, 1.442695
  %v2073 = vpow.pop %v2072
  %v2074 = vadd.f32 %v2073, 1.0
  %v2075 = vrcp.pop %v2074
  %v2076 = vmul.f32 1.0, %v2075
  %v2077 = vmul.f32 %v2076, 9.0
  %v2078 = vadd.f32 %v2077, 1.0
  %vm2079 = vcmask 1024
  %2080 = vst.msk [vmem:[%s2] sm:$0x3] %vm2079, %v2078
  // Predicated region
  $region10: #{aesthetic_predictor.1} parent=0 // pred_check
    _
  $region11: #{aesthetic_predictor.1} parent=0 // pred_check_branch
    %2082 = sbr.rel (0) target = $region13
  $region12: #{aesthetic_predictor.1} parent=0 // pred_region
    _
  $region13: #{aesthetic_predictor.1} parent=0 // pred_fallthru
    _
  // Predicated region
  $region14: #{aesthetic_predictor.1} parent=0 // pred_check
    _
  $region15: #{aesthetic_predictor.1} parent=0 // pred_check_branch
    %2084 = sbr.rel (0) target = $region17
  $region16: #{aesthetic_predictor.1} parent=0 // pred_region
    _
  $region17: #{aesthetic_predictor.1} parent=0 // pred_fallthru
    _

</llo_original>
